<compile_context>
chip_gen: v6e
topology: v6e:2x2x1
jax: 0.10.0
libtpu: 0.0.40
codegen_flags: <defaults>
</compile_context>

<pallas_src>
import functools

import jax
import jax.numpy as jnp
from jax.experimental import pallas as pl
from jax.experimental.pallas import tpu as pltpu

INPUT_SIZE = 64 + 64 + 64 + 1        # 193
L1, L2, L3, OUT = 1024, 64, 32, 3

IN_PAD = 256                          # 193 -> 256 (multiple of 128 lanes)
OUT_PAD = 128                         # 3   -> 128 lanes for the fc4 matmul / softmax


def _cdiv(a, b):
    return -(-a // b)


def _round_up(a, m):
    return _cdiv(a, m) * m


def _nnue_kernel(x_ref, w1_ref, b1_ref, w2_ref, b2_ref,
                 w3_ref, b3_ref, w4_ref, b4_ref, o_ref, xpad_ref):
    # In-kernel zero-pad (193 -> 256 features) + bf16 cast of x.
    # f32 scratch: word-granular masked store, pad columns exactly 0 every step
    # (scratch is re-zeroed per step, so "parallel" grid semantics stay safe).
    xpad_ref[...] = jnp.zeros_like(xpad_ref)
    xpad_ref[:, :INPUT_SIZE] = x_ref[...]
    x = xpad_ref[...].astype(jnp.bfloat16)

    # fc1: bf16 MXU matmul, f32 accumulate; bias-add + clamp(0,1) in bf16
    # (cast accumulator first; b1 stored bf16) to halve VALU work on (tile, 1024).
    h = jnp.dot(x, w1_ref[...], preferred_element_type=jnp.float32).astype(jnp.bfloat16)
    h = jnp.clip(h + b1_ref[...], 0.0, 1.0)
    # fc2 + clamp(0,1)
    h = jnp.dot(h, w2_ref[...], preferred_element_type=jnp.float32).astype(jnp.bfloat16)
    h = jnp.clip(h + b2_ref[...], 0.0, 1.0)
    # fc3 + clamp(0,1)
    h = jnp.dot(h, w3_ref[...], preferred_element_type=jnp.float32).astype(jnp.bfloat16)
    h = jnp.clip(h + b3_ref[...], 0.0, 1.0)
    # fc4 + softmax over classes, all in f32.  Padded class lanes carry bias -1e30
    # -> exp underflows to exactly 0.  Real logits are bounded (h in [0,1], small w4),
    # so the max-subtraction is unnecessary and skipped (saves one XLU reduce + VPU sub).
    logits = jnp.dot(h, w4_ref[...], preferred_element_type=jnp.float32) + b4_ref[...]
    e = jnp.exp(logits)                                   # EUP
    denom = jnp.sum(e, axis=1, keepdims=True)
    probs = e * pl.reciprocal(denom, approx=True)         # EUP reciprocal, no VALU divide
    o_ref[...] = probs[:, :OUT]                           # write only the 3 real classes


@functools.partial(jax.jit, static_argnames=("block_b",))
def nnue_forward(x, params, block_b=1024):
    """x: (B, INPUT_SIZE) float32 -> (B, 3) float32 softmax probabilities."""
    w1, b1, w2, b2, w3, b3, w4, b4 = params
    x = x.astype(jnp.float32)
    B = x.shape[0]

    # ---- tile selection (trace-time Python on static shapes) ----------------
    # Even number of equal grid steps (>= 2 when the batch allows) so the 2
    # TensorCores on v7x are balanced; each step as large as block_b permits.
    b8 = _round_up(B, 8)
    if b8 <= 16:
        tile, steps = b8, 1
    else:
        steps = _cdiv(b8, block_b)
        steps = max(2, steps + (steps & 1))        # round up to even, >= 2
        tile = _round_up(_cdiv(b8, steps), 8)
    b_pad = tile * steps
    grid = (steps,)

    # Only row-padding (if any) happens in the wrapper; feature padding + bf16 cast
    # are done inside the kernel (no extra HBM round trip over the whole batch).
    if b_pad != B:
        x = jnp.pad(x, ((0, b_pad - B), (0, 0)))

    full = lambda i: (0, 0)
    single = pl.Buffered(1)   # grid-invariant weights/biases: no double buffering

    flops = 2 * b_pad * (IN_PAD * L1 + L1 * L2 + L2 * L3 + L3 * OUT_PAD)
    bytes_accessed = (b_pad * (INPUT_SIZE * 4 + OUT * 4)
                      + (IN_PAD * L1 + L1 * L2 + L2 * L3 + L3 * OUT_PAD) * 2
                      + (L1 + L2 + L3) * 2 + OUT_PAD * 4)
    cost = pl.CostEstimate(flops=flops,
                           transcendentals=b_pad * (OUT_PAD + 1),
                           bytes_accessed=bytes_accessed)

    out = pl.pallas_call(
        _nnue_kernel,
        out_shape=jax.ShapeDtypeStruct((b_pad, OUT), jnp.float32),
        grid_spec=pltpu.PrefetchScalarGridSpec(
            num_scalar_prefetch=0,
            grid=grid,
            in_specs=[
                pl.BlockSpec((tile, INPUT_SIZE), lambda i: (i, 0)),        # x (f32, unpadded)
                pl.BlockSpec((IN_PAD, L1), full, pipeline_mode=single),    # w1 (bf16)
                pl.BlockSpec((1, L1), full, pipeline_mode=single),         # b1 (bf16)
                pl.BlockSpec((L1, L2), full, pipeline_mode=single),        # w2 (bf16)
                pl.BlockSpec((1, L2), full, pipeline_mode=single),         # b2 (bf16)
                pl.BlockSpec((L2, L3), full, pipeline_mode=single),        # w3 (bf16)
                pl.BlockSpec((1, L3), full, pipeline_mode=single),         # b3 (bf16)
                pl.BlockSpec((L3, OUT_PAD), full, pipeline_mode=single),   # w4 (bf16)
                pl.BlockSpec((1, OUT_PAD), full, pipeline_mode=single),    # b4 (f32, -1e30 pad)
            ],
            out_specs=pl.BlockSpec((tile, OUT), lambda i: (i, 0)),
            scratch_shapes=[pltpu.VMEM((tile, IN_PAD), jnp.float32)],
        ),
        compiler_params=pltpu.CompilerParams(
            dimension_semantics=("parallel",),
            vmem_limit_bytes=48 * 1024 * 1024),
        cost_estimate=cost,
    )(x, w1, b1, w2, b2, w3, b3, w4, b4)

    return out if b_pad == B else out[:B]


def init_params(key):
    """Deterministic init mimicking nn.Linear shapes (weights stored transposed)."""
    ks = jax.random.split(key, 8)

    def linear(kw, kb, fan_in, fan_out):
        bound = 1.0 / jnp.sqrt(fan_in)
        w = jax.random.uniform(kw, (fan_in, fan_out), jnp.float32, -bound, bound)
        b = jax.random.uniform(kb, (1, fan_out), jnp.float32, -bound, bound)
        return w, b

    w1, b1 = linear(ks[0], ks[1], INPUT_SIZE, L1)
    w2, b2 = linear(ks[2], ks[3], L1, L2)
    w3, b3 = linear(ks[4], ks[5], L2, L3)
    w4, b4 = linear(ks[6], ks[7], L3, OUT)

    # Pad once, offline: zero rows for padded input features; zero cols / -1e30
    # biases for padded output classes (softmax over padded lanes == softmax over 3).
    w1_p = jnp.zeros((IN_PAD, L1), jnp.float32).at[:INPUT_SIZE, :].set(w1)
    w4_p = jnp.zeros((L3, OUT_PAD), jnp.float32).at[:, :OUT].set(w4)
    b4_p = jnp.full((1, OUT_PAD), -1e30, jnp.float32).at[:, :OUT].set(b4)

    # Weights in bf16 (MXU inputs); b1/b2/b3 in bf16 (bf16 bias-add/clip path);
    # b4 stays f32 (the -1e30 padded-lane trick must never drop to bf16).
    return (w1_p.astype(jnp.bfloat16), b1.astype(jnp.bfloat16),
            w2.astype(jnp.bfloat16), b2.astype(jnp.bfloat16),
            w3.astype(jnp.bfloat16), b3.astype(jnp.bfloat16),
            w4_p.astype(jnp.bfloat16), b4_p)


def reference_forward(x, params):
    """Plain-JAX f32 reference with the same (bf16-stored) weights."""
    w1, b1, w2, b2, w3, b3, w4, b4 = params
    w1 = w1.astype(jnp.float32)
    w2 = w2.astype(jnp.float32)
    w3 = w3.astype(jnp.float32)
    w4 = w4.astype(jnp.float32)
    b1 = b1.astype(jnp.float32)
    b2 = b2.astype(jnp.float32)
    b3 = b3.astype(jnp.float32)
    h = jnp.clip(x @ w1[:INPUT_SIZE] + b1, 0.0, 1.0)
    h = jnp.clip(h @ w2 + b2, 0.0, 1.0)
    h = jnp.clip(h @ w3 + b3, 0.0, 1.0)
    logits = h @ w4[:, :OUT] + b4[:, :OUT]
    return jax.nn.softmax(logits, axis=1)


if __name__ == "__main__":
    key = jax.random.PRNGKey(0)
    kp, kx = jax.random.split(key)
    params = init_params(kp)

    # Small correctness check (single grid step, tile=8).
    B_small = 8
    x_small = jax.random.uniform(kx, (B_small, INPUT_SIZE), jnp.float32, 0.0, 1.0)
    out_small = jax.block_until_ready(nnue_forward(x_small, params))
    ref_small = reference_forward(x_small, params)
    assert out_small.shape == (B_small, OUT)
    # bf16 matmul inputs / bf16 bias+clamp with f32 accumulation -> relaxed tolerance.
    assert jnp.allclose(out_small, ref_small, atol=2e-2, rtol=2e-2), (out_small, ref_small)
    assert jnp.allclose(jnp.sum(out_small, axis=1), 1.0, atol=5e-3)

    # Larger batch: even 2-step grid (tile=256), both TensorCores busy on v7x.
    B_big = 512
    x_big = jax.random.uniform(jax.random.PRNGKey(1), (B_big, INPUT_SIZE),
                               jnp.float32, 0.0, 1.0)
    out_big = jax.block_until_ready(nnue_forward(x_big, params))
    ref_big = reference_forward(x_big, params)
    assert out_big.shape == (B_big, OUT)
    assert jnp.allclose(out_big, ref_big, atol=2e-2, rtol=2e-2)
    assert jnp.allclose(jnp.sum(out_big, axis=1), 1.0, atol=5e-3)

    # Odd batch: exercises row-padding and the balanced even-grid split (B=1000 -> 2x504).
    B_odd = 1000
    x_odd = jax.random.uniform(jax.random.PRNGKey(2), (B_odd, INPUT_SIZE),
                               jnp.float32, 0.0, 1.0)
    out_odd = jax.block_until_ready(nnue_forward(x_odd, params))
    ref_odd = reference_forward(x_odd, params)
    assert out_odd.shape == (B_odd, OUT)
    assert jnp.allclose(out_odd, ref_odd, atol=2e-2, rtol=2e-2)
    assert jnp.allclose(jnp.sum(out_odd, axis=1), 1.0, atol=5e-3)

    print("KERNEL_OK")
</pallas_src>

<mosaic_0001>
module attributes {stable_mosaic.version = 11 : i64} {
  func.func @_nnue_kernel(%arg0: i32, %arg1: memref<8x193xf32, #tpu.memory_space<vmem>>, %arg2: memref<256x1024xbf16, #tpu.memory_space<vmem>>, %arg3: memref<1x1024xbf16, #tpu.memory_space<vmem>>, %arg4: memref<1024x64xbf16, #tpu.memory_space<vmem>>, %arg5: memref<1x64xbf16, #tpu.memory_space<vmem>>, %arg6: memref<64x32xbf16, #tpu.memory_space<vmem>>, %arg7: memref<1x32xbf16, #tpu.memory_space<vmem>>, %arg8: memref<32x128xbf16, #tpu.memory_space<vmem>>, %arg9: memref<1x128xf32, #tpu.memory_space<vmem>>, %arg10: memref<8x3xf32, #tpu.memory_space<vmem>>, %arg11: memref<8x256xf32, #tpu.memory_space<vmem>>) attributes {dimension_semantics = [#tpu.dimension_semantics<parallel>], iteration_bounds = array<i64: 1>, scalar_prefetch = 0 : i64, scratch_operands = 1 : i64, tpu.core_type = #tpu.core_type<tc>, window_params = [{transform_indices = @transform_0, window_bounds = array<i64: 8, 193>}, {pipeline_mode = #tpu.pipeline_mode<synchronous>, transform_indices = @transform_1, window_bounds = array<i64: 256, 1024>}, {pipeline_mode = #tpu.pipeline_mode<synchronous>, transform_indices = @transform_2, window_bounds = array<i64: 1, 1024>}, {pipeline_mode = #tpu.pipeline_mode<synchronous>, transform_indices = @transform_3, window_bounds = array<i64: 1024, 64>}, {pipeline_mode = #tpu.pipeline_mode<synchronous>, transform_indices = @transform_4, window_bounds = array<i64: 1, 64>}, {pipeline_mode = #tpu.pipeline_mode<synchronous>, transform_indices = @transform_5, window_bounds = array<i64: 64, 32>}, {pipeline_mode = #tpu.pipeline_mode<synchronous>, transform_indices = @transform_6, window_bounds = array<i64: 1, 32>}, {pipeline_mode = #tpu.pipeline_mode<synchronous>, transform_indices = @transform_7, window_bounds = array<i64: 32, 128>}, {pipeline_mode = #tpu.pipeline_mode<synchronous>, transform_indices = @transform_8, window_bounds = array<i64: 1, 128>}, {transform_indices = @transform_9, window_bounds = array<i64: 8, 3>}]} {
    %cst = arith.constant 0.000000e+00 : f32
    %0 = vector.broadcast %cst : f32 to vector<8x256xf32>
    %c0 = arith.constant 0 : index
    %c0_0 = arith.constant 0 : index
    %1 = vector.load %arg11[%c0, %c0_0] : memref<8x256xf32, #tpu.memory_space<vmem>>, vector<8x256xf32>
    tpu.vector_store %arg11[%c0, %c0_0], %0 {strides = array<i32>} : memref<8x256xf32, #tpu.memory_space<vmem>>, vector<8x256xf32>,
    %c0_1 = arith.constant 0 : index
    %c0_2 = arith.constant 0 : index
    %2 = vector.load %arg1[%c0_1, %c0_2] : memref<8x193xf32, #tpu.memory_space<vmem>>, vector<8x193xf32>
    %c0_3 = arith.constant 0 : index
    %c0_4 = arith.constant 0 : index
    %3 = vector.load %arg11[%c0_3, %c0_4] : memref<8x256xf32, #tpu.memory_space<vmem>>, vector<8x193xf32>
    tpu.vector_store %arg11[%c0_3, %c0_4], %2 {strides = array<i32>} : memref<8x256xf32, #tpu.memory_space<vmem>>, vector<8x193xf32>,
    %c0_5 = arith.constant 0 : index
    %c0_6 = arith.constant 0 : index
    %4 = vector.load %arg11[%c0_5, %c0_6] : memref<8x256xf32, #tpu.memory_space<vmem>>, vector<8x256xf32>
    %5 = arith.truncf %4 : vector<8x256xf32> to vector<8x256xbf16>
    %c0_7 = arith.constant 0 : index
    %c0_8 = arith.constant 0 : index
    %6 = vector.load %arg2[%c0_7, %c0_8] : memref<256x1024xbf16, #tpu.memory_space<vmem>>, vector<256x1024xbf16>
    %cst_9 = arith.constant dense<0.000000e+00> : vector<8x1024xf32>
    %7 = tpu.matmul %5, %6, %cst_9 {dimension_numbers = #tpu.dot_dimension_numbers<[1], [0], [0], [1], [0, 0, 1, 1], [], []>} : vector<8x256xbf16>, vector<256x1024xbf16>, vector<8x1024xf32> -> vector<8x1024xf32>
    %8 = arith.truncf %7 : vector<8x1024xf32> to vector<8x1024xbf16>
    %c0_10 = arith.constant 0 : index
    %c0_11 = arith.constant 0 : index
    %9 = vector.load %arg3[%c0_10, %c0_11] : memref<1x1024xbf16, #tpu.memory_space<vmem>>, vector<1x1024xbf16>
    %10 = vector.broadcast %9 : vector<1x1024xbf16> to vector<8x1024xbf16>
    %11 = arith.addf %8, %10 : vector<8x1024xbf16>
    %cst_12 = arith.constant 0.000000e+00 : f32
    %cst_13 = arith.constant 1.000000e+00 : f32
    %12 = arith.truncf %cst_12 : f32 to bf16
    %13 = vector.broadcast %12 : bf16 to vector<8x1024xbf16>
    %14 = arith.maximumf %13, %11 : vector<8x1024xbf16>
    %15 = arith.truncf %cst_13 : f32 to bf16
    %16 = vector.broadcast %15 : bf16 to vector<8x1024xbf16>
    %17 = arith.minimumf %16, %14 : vector<8x1024xbf16>
    %c0_14 = arith.constant 0 : index
    %c0_15 = arith.constant 0 : index
    %18 = vector.load %arg4[%c0_14, %c0_15] : memref<1024x64xbf16, #tpu.memory_space<vmem>>, vector<1024x64xbf16>
    %cst_16 = arith.constant dense<0.000000e+00> : vector<8x64xf32>
    %19 = tpu.matmul %17, %18, %cst_16 {dimension_numbers = #tpu.dot_dimension_numbers<[1], [0], [0], [1], [0, 0, 1, 1], [], []>} : vector<8x1024xbf16>, vector<1024x64xbf16>, vector<8x64xf32> -> vector<8x64xf32>
    %20 = arith.truncf %19 : vector<8x64xf32> to vector<8x64xbf16>
    %c0_17 = arith.constant 0 : index
    %c0_18 = arith.constant 0 : index
    %21 = vector.load %arg5[%c0_17, %c0_18] : memref<1x64xbf16, #tpu.memory_space<vmem>>, vector<1x64xbf16>
    %22 = vector.broadcast %21 : vector<1x64xbf16> to vector<8x64xbf16>
    %23 = arith.addf %20, %22 : vector<8x64xbf16>
    %cst_19 = arith.constant 0.000000e+00 : f32
    %cst_20 = arith.constant 1.000000e+00 : f32
    %24 = arith.truncf %cst_19 : f32 to bf16
    %25 = vector.broadcast %24 : bf16 to vector<8x64xbf16>
    %26 = arith.maximumf %25, %23 : vector<8x64xbf16>
    %27 = arith.truncf %cst_20 : f32 to bf16
    %28 = vector.broadcast %27 : bf16 to vector<8x64xbf16>
    %29 = arith.minimumf %28, %26 : vector<8x64xbf16>
    %c0_21 = arith.constant 0 : index
    %c0_22 = arith.constant 0 : index
    %30 = vector.load %arg6[%c0_21, %c0_22] : memref<64x32xbf16, #tpu.memory_space<vmem>>, vector<64x32xbf16>
    %cst_23 = arith.constant dense<0.000000e+00> : vector<8x32xf32>
    %31 = tpu.matmul %29, %30, %cst_23 {dimension_numbers = #tpu.dot_dimension_numbers<[1], [0], [0], [1], [0, 0, 1, 1], [], []>} : vector<8x64xbf16>, vector<64x32xbf16>, vector<8x32xf32> -> vector<8x32xf32>
    %32 = arith.truncf %31 : vector<8x32xf32> to vector<8x32xbf16>
    %c0_24 = arith.constant 0 : index
    %c0_25 = arith.constant 0 : index
    %33 = vector.load %arg7[%c0_24, %c0_25] : memref<1x32xbf16, #tpu.memory_space<vmem>>, vector<1x32xbf16>
    %34 = vector.broadcast %33 : vector<1x32xbf16> to vector<8x32xbf16>
    %35 = arith.addf %32, %34 : vector<8x32xbf16>
    %cst_26 = arith.constant 0.000000e+00 : f32
    %cst_27 = arith.constant 1.000000e+00 : f32
    %36 = arith.truncf %cst_26 : f32 to bf16
    %37 = vector.broadcast %36 : bf16 to vector<8x32xbf16>
    %38 = arith.maximumf %37, %35 : vector<8x32xbf16>
    %39 = arith.truncf %cst_27 : f32 to bf16
    %40 = vector.broadcast %39 : bf16 to vector<8x32xbf16>
    %41 = arith.minimumf %40, %38 : vector<8x32xbf16>
    %c0_28 = arith.constant 0 : index
    %c0_29 = arith.constant 0 : index
    %42 = vector.load %arg8[%c0_28, %c0_29] : memref<32x128xbf16, #tpu.memory_space<vmem>>, vector<32x128xbf16>
    %cst_30 = arith.constant dense<0.000000e+00> : vector<8x128xf32>
    %43 = tpu.matmul %41, %42, %cst_30 {dimension_numbers = #tpu.dot_dimension_numbers<[1], [0], [0], [1], [0, 0, 1, 1], [], []>} : vector<8x32xbf16>, vector<32x128xbf16>, vector<8x128xf32> -> vector<8x128xf32>
    %c0_31 = arith.constant 0 : index
    %c0_32 = arith.constant 0 : index
    %44 = vector.load %arg9[%c0_31, %c0_32] : memref<1x128xf32, #tpu.memory_space<vmem>>, vector<1x128xf32>
    %45 = vector.broadcast %44 : vector<1x128xf32> to vector<8x128xf32>
    %46 = arith.addf %43, %45 : vector<8x128xf32>
    %47 = math.exp %46 : vector<8x128xf32>
    %cst_33 = arith.constant dense<0.000000e+00> : vector<8xf32>
    %48 = vector.multi_reduction <add>, %47, %cst_33 [1] : vector<8x128xf32> to vector<8xf32>
    %49 = vector.shape_cast %48 : vector<8xf32> to vector<8x1xf32>
    %50 = tpu.reciprocal %49 {approx = true} : vector<8x1xf32> -> vector<8x1xf32>
    %51 = vector.broadcast %50 : vector<8x1xf32> to vector<8x128xf32>
    %52 = arith.mulf %47, %51 : vector<8x128xf32>
    %53 = vector.extract_strided_slice %52 {offsets = [0, 0], sizes = [8, 3], strides = [1, 1]} : vector<8x128xf32> to vector<8x3xf32>
    %c0_34 = arith.constant 0 : index
    %c0_35 = arith.constant 0 : index
    %54 = vector.load %arg10[%c0_34, %c0_35] : memref<8x3xf32, #tpu.memory_space<vmem>>, vector<8x3xf32>
    tpu.vector_store %arg10[%c0_34, %c0_35], %53 {strides = array<i32>} : memref<8x3xf32, #tpu.memory_space<vmem>>, vector<8x3xf32>,
    return
  }
  func.func @transform_0(%arg0: i32) -> (i32, i32) {
    %c0_i32 = arith.constant 0 : i32
    %c0_i32_0 = arith.constant 0 : i32
    return %arg0, %c0_i32 : i32, i32
  }
  func.func @transform_1(%arg0: i32) -> (i32, i32) {
    %c0_i32 = arith.constant 0 : i32
    %c0_i32_0 = arith.constant 0 : i32
    %c0_i32_1 = arith.constant 0 : i32
    return %c0_i32, %c0_i32_0 : i32, i32
  }
  func.func @transform_2(%arg0: i32) -> (i32, i32) {
    %c0_i32 = arith.constant 0 : i32
    %c0_i32_0 = arith.constant 0 : i32
    %c0_i32_1 = arith.constant 0 : i32
    return %c0_i32, %c0_i32_0 : i32, i32
  }
  func.func @transform_3(%arg0: i32) -> (i32, i32) {
    %c0_i32 = arith.constant 0 : i32
    %c0_i32_0 = arith.constant 0 : i32
    %c0_i32_1 = arith.constant 0 : i32
    return %c0_i32, %c0_i32_0 : i32, i32
  }
  func.func @transform_4(%arg0: i32) -> (i32, i32) {
    %c0_i32 = arith.constant 0 : i32
    %c0_i32_0 = arith.constant 0 : i32
    %c0_i32_1 = arith.constant 0 : i32
    return %c0_i32, %c0_i32_0 : i32, i32
  }
  func.func @transform_5(%arg0: i32) -> (i32, i32) {
    %c0_i32 = arith.constant 0 : i32
    %c0_i32_0 = arith.constant 0 : i32
    %c0_i32_1 = arith.constant 0 : i32
    return %c0_i32, %c0_i32_0 : i32, i32
  }
  func.func @transform_6(%arg0: i32) -> (i32, i32) {
    %c0_i32 = arith.constant 0 : i32
    %c0_i32_0 = arith.constant 0 : i32
    %c0_i32_1 = arith.constant 0 : i32
    return %c0_i32, %c0_i32_0 : i32, i32
  }
  func.func @transform_7(%arg0: i32) -> (i32, i32) {
    %c0_i32 = arith.constant 0 : i32
    %c0_i32_0 = arith.constant 0 : i32
    %c0_i32_1 = arith.constant 0 : i32
    return %c0_i32, %c0_i32_0 : i32, i32
  }
  func.func @transform_8(%arg0: i32) -> (i32, i32) {
    %c0_i32 = arith.constant 0 : i32
    %c0_i32_0 = arith.constant 0 : i32
    %c0_i32_1 = arith.constant 0 : i32
    return %c0_i32, %c0_i32_0 : i32, i32
  }
  func.func @transform_9(%arg0: i32) -> (i32, i32) {
    %c0_i32 = arith.constant 0 : i32
    %c0_i32_0 = arith.constant 0 : i32
    return %arg0, %c0_i32 : i32, i32
  }
}

</mosaic_0001>

<llo_original>
// kernel: nnue_forward.1
$region0: #{nnue_forward.1}
  #allocation0 [shape = 'u32[]', space=smem, size = 0x4, offset = 0x4, fixed_abs, tag = 'smem constant byte address 0x4 - core index']
  #allocation1 [shape = 'u32[144,128]{1,0:T(1,128)}', space=vmem, size = 0x12000, scoped, tag = 'internal scratch']
  #allocation2 [shape = 'f32[8,256]{1,0:T(8,128)}', space=vmem, size = 0x2000, scoped, tag = 'scratch operand']
  %s0 = inlined_call_operand.vmem [shape: f32[8,193], index: 0, kind: input, shape index: {}]
  %s1 = inlined_call_operand.hbm [shape: bf16[256,1024], index: 1, kind: input, shape index: {}]
  %s2 = inlined_call_operand.vmem [shape: bf16[1,1024], index: 2, kind: input, shape index: {}]
  %s3 = inlined_call_operand.vmem [shape: bf16[1024,64], index: 3, kind: input, shape index: {}]
  %s4 = inlined_call_operand.vmem [shape: bf16[1,64], index: 4, kind: input, shape index: {}]
  %s5 = inlined_call_operand.vmem [shape: bf16[64,32], index: 5, kind: input, shape index: {}]
  %s6 = inlined_call_operand.vmem [shape: bf16[1,32], index: 6, kind: input, shape index: {}]
  %s7 = inlined_call_operand.vmem [shape: bf16[32,128], index: 7, kind: input, shape index: {}]
  %s8 = inlined_call_operand.vmem [shape: f32[1,128], index: 8, kind: input, shape index: {}]
  %s9 = inlined_call_operand.vmem [shape: f32[8,3], index: 9, kind: output, shape index: {}]
  %s10 = sld [smem:[#allocation0]]
  $region50: #{nnue_forward.1} parent=0
    _
  %s12 = ssub.s32 1, %s10
  %s13 = scalar_select 0, %s12, %s10
  $region1: #{nnue_forward.1} parent=0
    #allocation3 [shape = 'u8[524288]{0}', space=vmem, size = 0x80000, scoped, tag = 'input window, operand 1, single buffered']
    #allocation4 [shape = 's32[1]{0}', space=sflag, size = 0x4, scoped, tag = 'scoped memory for nnue_forward.1']
    %14 = vsyncpa [#allocation4], 0
    // Predicated region
    $region2: #{nnue_forward.1} parent=1 // pred_check
      _
    $region3: #{nnue_forward.1} parent=1 // pred_check_branch
      %16 = sbr.rel (0) target = $region5
    $region4: #{nnue_forward.1} parent=1 // pred_region
      _
    $region5: #{nnue_forward.1} parent=1 // pred_fallthru
      _
    // Predicated region
    $region6: #{nnue_forward.1} parent=1 // pred_check
      _
    $region7: #{nnue_forward.1} parent=1 // pred_check_branch
      %18 = sbr.rel (0) target = $region9
    $region8: #{nnue_forward.1} parent=1 // pred_region
      %s20 = ssub.s32 16384, 16384
      %21 = vsyncadd [#allocation4], %s20
      %s22 = sshll.u32 [#allocation3], 4
      %s23 = int_to_ptr.vmem [resolvable:$true] %s22
      %28 = dma.hbm_to_vmem [thread:$0]  %s1, 16384, %s23, [#allocation4], 512, 512, 32
    $region9: #{nnue_forward.1} parent=1 // pred_fallthru
      _
    // Predicated region
    $region10: #{nnue_forward.1} parent=1 // pred_check
      _
    $region11: #{nnue_forward.1} parent=1 // pred_check_branch
      %30 = sbr.rel (0) target = $region13
    $region12: #{nnue_forward.1} parent=1 // pred_region
      _
    $region13: #{nnue_forward.1} parent=1 // pred_fallthru
      _
    // Predicated region
    $region14: #{nnue_forward.1} parent=1 // pred_check
      _
    $region15: #{nnue_forward.1} parent=1 // pred_check_branch
      %32 = sbr.rel (0) target = $region17
    $region16: #{nnue_forward.1} parent=1 // pred_region
      _
    $region17: #{nnue_forward.1} parent=1 // pred_fallthru
      _
    // Predicated region
    $region18: #{nnue_forward.1} parent=1 // pred_check
      _
    $region19: #{nnue_forward.1} parent=1 // pred_check_branch
      %34 = sbr.rel (0) target = $region21
    $region20: #{nnue_forward.1} parent=1 // pred_region
      _
    $region21: #{nnue_forward.1} parent=1 // pred_fallthru
      _
    // Predicated region
    $region22: #{nnue_forward.1} parent=1 // pred_check
      _
    $region23: #{nnue_forward.1} parent=1 // pred_check_branch
      %36 = sbr.rel (0) target = $region25
    $region24: #{nnue_forward.1} parent=1 // pred_region
      _
    $region25: #{nnue_forward.1} parent=1 // pred_fallthru
      _
    // Predicated region
    $region26: #{nnue_forward.1} parent=1 // pred_check
      _
    $region27: #{nnue_forward.1} parent=1 // pred_check_branch
      %38 = sbr.rel (0) target = $region29
    $region28: #{nnue_forward.1} parent=1 // pred_region
      _
    $region29: #{nnue_forward.1} parent=1 // pred_fallthru
      _
    // Predicated region
    $region30: #{nnue_forward.1} parent=1 // pred_check
      _
    $region31: #{nnue_forward.1} parent=1 // pred_check_branch
      %40 = sbr.rel (0) target = $region33
    $region32: #{nnue_forward.1} parent=1 // pred_region
      _
    $region33: #{nnue_forward.1} parent=1 // pred_fallthru
      _
    // Predicated region
    $region34: #{nnue_forward.1} parent=1 // pred_check
      _
    $region35: #{nnue_forward.1} parent=1 // pred_check_branch
      %42 = sbr.rel (0) target = $region37
    $region36: #{nnue_forward.1} parent=1 // pred_region
      _
    $region37: #{nnue_forward.1} parent=1 // pred_fallthru
      _
    // Predicated region
    $region38: #{nnue_forward.1} parent=1 // pred_check
      _
    $region39: #{nnue_forward.1} parent=1 // pred_check_branch
      %44 = sbr.rel (0) target = $region41
    $region40: #{nnue_forward.1} parent=1 // pred_region
      %45 = dma.done [#allocation4], 16384
    $region41: #{nnue_forward.1} parent=1 // pred_fallthru
      _
    %48 = vst [vmem:[#allocation2] sm:$0xff] 0.0
    %49 = vst [vmem:[#allocation2 + $0x8] sm:$0xff] 0.0
    %v50 = vld [vmem:[%s0] sm:$0xff]
    %v51 = vld [vmem:[%s0 + $0x8] sm:$0xff]
    %52 = vst [vmem:[#allocation2] sm:$0xff] %v50
    %vm53 = vcmask 531456
    %54 = vst.msk [vmem:[#allocation2 + $0x8] sm:$0xff] %vm53, %v51
    %v55 = vld [vmem:[#allocation2] sm:$0xff]
    %v56 = vld [vmem:[#allocation2 + $0x8] sm:$0xff]
    %v57 = vpack.c.bf16 %v55, %v55
    %v58 = vpack.c.bf16 %v56, %v56
    %v59 = vld [vmem:[#allocation3] sm:$0xff]
    %v60 = vld [vmem:[#allocation3 + $0x8] sm:$0xff]
    %v61 = vld [vmem:[#allocation3 + $0x10] sm:$0xff]
    %v62 = vld [vmem:[#allocation3 + $0x18] sm:$0xff]
    %v63 = vld [vmem:[#allocation3 + $0x20] sm:$0xff]
    %v64 = vld [vmem:[#allocation3 + $0x28] sm:$0xff]
    %v65 = vld [vmem:[#allocation3 + $0x30] sm:$0xff]
    %v66 = vld [vmem:[#allocation3 + $0x38] sm:$0xff]
    %v67 = vld [vmem:[#allocation3 + $0x40] sm:$0xff]
    %v68 = vld [vmem:[#allocation3 + $0x48] sm:$0xff]
    %v69 = vld [vmem:[#allocation3 + $0x50] sm:$0xff]
    %v70 = vld [vmem:[#allocation3 + $0x58] sm:$0xff]
    %v71 = vld [vmem:[#allocation3 + $0x60] sm:$0xff]
    %v72 = vld [vmem:[#allocation3 + $0x68] sm:$0xff]
    %v73 = vld [vmem:[#allocation3 + $0x70] sm:$0xff]
    %v74 = vld [vmem:[#allocation3 + $0x78] sm:$0xff]
    %v75 = vld [vmem:[#allocation3 + $0x80] sm:$0xff]
    %v76 = vld [vmem:[#allocation3 + $0x88] sm:$0xff]
    %v77 = vld [vmem:[#allocation3 + $0x90] sm:$0xff]
    %v78 = vld [vmem:[#allocation3 + $0x98] sm:$0xff]
    %v79 = vld [vmem:[#allocation3 + $0xa0] sm:$0xff]
    %v80 = vld [vmem:[#allocation3 + $0xa8] sm:$0xff]
    %v81 = vld [vmem:[#allocation3 + $0xb0] sm:$0xff]
    %v82 = vld [vmem:[#allocation3 + $0xb8] sm:$0xff]
    %v83 = vld [vmem:[#allocation3 + $0xc0] sm:$0xff]
    %v84 = vld [vmem:[#allocation3 + $0xc8] sm:$0xff]
    %v85 = vld [vmem:[#allocation3 + $0xd0] sm:$0xff]
    %v86 = vld [vmem:[#allocation3 + $0xd8] sm:$0xff]
    %v87 = vld [vmem:[#allocation3 + $0xe0] sm:$0xff]
    %v88 = vld [vmem:[#allocation3 + $0xe8] sm:$0xff]
    %v89 = vld [vmem:[#allocation3 + $0xf0] sm:$0xff]
    %v90 = vld [vmem:[#allocation3 + $0xf8] sm:$0xff]
    %v91 = vld [vmem:[#allocation3 + $0x100] sm:$0xff]
    %v92 = vld [vmem:[#allocation3 + $0x108] sm:$0xff]
    %v93 = vld [vmem:[#allocation3 + $0x110] sm:$0xff]
    %v94 = vld [vmem:[#allocation3 + $0x118] sm:$0xff]
    %v95 = vld [vmem:[#allocation3 + $0x120] sm:$0xff]
    %v96 = vld [vmem:[#allocation3 + $0x128] sm:$0xff]
    %v97 = vld [vmem:[#allocation3 + $0x130] sm:$0xff]
    %v98 = vld [vmem:[#allocation3 + $0x138] sm:$0xff]
    %v99 = vld [vmem:[#allocation3 + $0x140] sm:$0xff]
    %v100 = vld [vmem:[#allocation3 + $0x148] sm:$0xff]
    %v101 = vld [vmem:[#allocation3 + $0x150] sm:$0xff]
    %v102 = vld [vmem:[#allocation3 + $0x158] sm:$0xff]
    %v103 = vld [vmem:[#allocation3 + $0x160] sm:$0xff]
    %v104 = vld [vmem:[#allocation3 + $0x168] sm:$0xff]
    %v105 = vld [vmem:[#allocation3 + $0x170] sm:$0xff]
    %v106 = vld [vmem:[#allocation3 + $0x178] sm:$0xff]
    %v107 = vld [vmem:[#allocation3 + $0x180] sm:$0xff]
    %v108 = vld [vmem:[#allocation3 + $0x188] sm:$0xff]
    %v109 = vld [vmem:[#allocation3 + $0x190] sm:$0xff]
    %v110 = vld [vmem:[#allocation3 + $0x198] sm:$0xff]
    %v111 = vld [vmem:[#allocation3 + $0x1a0] sm:$0xff]
    %v112 = vld [vmem:[#allocation3 + $0x1a8] sm:$0xff]
    %v113 = vld [vmem:[#allocation3 + $0x1b0] sm:$0xff]
    %v114 = vld [vmem:[#allocation3 + $0x1b8] sm:$0xff]
    %v115 = vld [vmem:[#allocation3 + $0x1c0] sm:$0xff]
    %v116 = vld [vmem:[#allocation3 + $0x1c8] sm:$0xff]
    %v117 = vld [vmem:[#allocation3 + $0x1d0] sm:$0xff]
    %v118 = vld [vmem:[#allocation3 + $0x1d8] sm:$0xff]
    %v119 = vld [vmem:[#allocation3 + $0x1e0] sm:$0xff]
    %v120 = vld [vmem:[#allocation3 + $0x1e8] sm:$0xff]
    %v121 = vld [vmem:[#allocation3 + $0x1f0] sm:$0xff]
    %v122 = vld [vmem:[#allocation3 + $0x1f8] sm:$0xff]
    %v123 = vld [vmem:[#allocation3 + $0x200] sm:$0xff]
    %v124 = vld [vmem:[#allocation3 + $0x208] sm:$0xff]
    %v125 = vld [vmem:[#allocation3 + $0x210] sm:$0xff]
    %v126 = vld [vmem:[#allocation3 + $0x218] sm:$0xff]
    %v127 = vld [vmem:[#allocation3 + $0x220] sm:$0xff]
    %v128 = vld [vmem:[#allocation3 + $0x228] sm:$0xff]
    %v129 = vld [vmem:[#allocation3 + $0x230] sm:$0xff]
    %v130 = vld [vmem:[#allocation3 + $0x238] sm:$0xff]
    %v131 = vld [vmem:[#allocation3 + $0x240] sm:$0xff]
    %v132 = vld [vmem:[#allocation3 + $0x248] sm:$0xff]
    %v133 = vld [vmem:[#allocation3 + $0x250] sm:$0xff]
    %v134 = vld [vmem:[#allocation3 + $0x258] sm:$0xff]
    %v135 = vld [vmem:[#allocation3 + $0x260] sm:$0xff]
    %v136 = vld [vmem:[#allocation3 + $0x268] sm:$0xff]
    %v137 = vld [vmem:[#allocation3 + $0x270] sm:$0xff]
    %v138 = vld [vmem:[#allocation3 + $0x278] sm:$0xff]
    %v139 = vld [vmem:[#allocation3 + $0x280] sm:$0xff]
    %v140 = vld [vmem:[#allocation3 + $0x288] sm:$0xff]
    %v141 = vld [vmem:[#allocation3 + $0x290] sm:$0xff]
    %v142 = vld [vmem:[#allocation3 + $0x298] sm:$0xff]
    %v143 = vld [vmem:[#allocation3 + $0x2a0] sm:$0xff]
    %v144 = vld [vmem:[#allocation3 + $0x2a8] sm:$0xff]
    %v145 = vld [vmem:[#allocation3 + $0x2b0] sm:$0xff]
    %v146 = vld [vmem:[#allocation3 + $0x2b8] sm:$0xff]
    %v147 = vld [vmem:[#allocation3 + $0x2c0] sm:$0xff]
    %v148 = vld [vmem:[#allocation3 + $0x2c8] sm:$0xff]
    %v149 = vld [vmem:[#allocation3 + $0x2d0] sm:$0xff]
    %v150 = vld [vmem:[#allocation3 + $0x2d8] sm:$0xff]
    %v151 = vld [vmem:[#allocation3 + $0x2e0] sm:$0xff]
    %v152 = vld [vmem:[#allocation3 + $0x2e8] sm:$0xff]
    %v153 = vld [vmem:[#allocation3 + $0x2f0] sm:$0xff]
    %v154 = vld [vmem:[#allocation3 + $0x2f8] sm:$0xff]
    %v155 = vld [vmem:[#allocation3 + $0x300] sm:$0xff]
    %v156 = vld [vmem:[#allocation3 + $0x308] sm:$0xff]
    %v157 = vld [vmem:[#allocation3 + $0x310] sm:$0xff]
    %v158 = vld [vmem:[#allocation3 + $0x318] sm:$0xff]
    %v159 = vld [vmem:[#allocation3 + $0x320] sm:$0xff]
    %v160 = vld [vmem:[#allocation3 + $0x328] sm:$0xff]
    %v161 = vld [vmem:[#allocation3 + $0x330] sm:$0xff]
    %v162 = vld [vmem:[#allocation3 + $0x338] sm:$0xff]
    %v163 = vld [vmem:[#allocation3 + $0x340] sm:$0xff]
    %v164 = vld [vmem:[#allocation3 + $0x348] sm:$0xff]
    %v165 = vld [vmem:[#allocation3 + $0x350] sm:$0xff]
    %v166 = vld [vmem:[#allocation3 + $0x358] sm:$0xff]
    %v167 = vld [vmem:[#allocation3 + $0x360] sm:$0xff]
    %v168 = vld [vmem:[#allocation3 + $0x368] sm:$0xff]
    %v169 = vld [vmem:[#allocation3 + $0x370] sm:$0xff]
    %v170 = vld [vmem:[#allocation3 + $0x378] sm:$0xff]
    %v171 = vld [vmem:[#allocation3 + $0x380] sm:$0xff]
    %v172 = vld [vmem:[#allocation3 + $0x388] sm:$0xff]
    %v173 = vld [vmem:[#allocation3 + $0x390] sm:$0xff]
    %v174 = vld [vmem:[#allocation3 + $0x398] sm:$0xff]
    %v175 = vld [vmem:[#allocation3 + $0x3a0] sm:$0xff]
    %v176 = vld [vmem:[#allocation3 + $0x3a8] sm:$0xff]
    %v177 = vld [vmem:[#allocation3 + $0x3b0] sm:$0xff]
    %v178 = vld [vmem:[#allocation3 + $0x3b8] sm:$0xff]
    %v179 = vld [vmem:[#allocation3 + $0x3c0] sm:$0xff]
    %v180 = vld [vmem:[#allocation3 + $0x3c8] sm:$0xff]
    %v181 = vld [vmem:[#allocation3 + $0x3d0] sm:$0xff]
    %v182 = vld [vmem:[#allocation3 + $0x3d8] sm:$0xff]
    %v183 = vld [vmem:[#allocation3 + $0x3e0] sm:$0xff]
    %v184 = vld [vmem:[#allocation3 + $0x3e8] sm:$0xff]
    %v185 = vld [vmem:[#allocation3 + $0x3f0] sm:$0xff]
    %v186 = vld [vmem:[#allocation3 + $0x3f8] sm:$0xff]
    %v315 = vunpack.c.l.b16 %v59
    %v316 = vunpack.c.h.b16 %v59
    %v317 = vunpack.c.l.b16 %v60
    %v318 = vunpack.c.h.b16 %v60
    %v319 = vunpack.c.l.b16 %v61
    %v320 = vunpack.c.h.b16 %v61
    %v321 = vunpack.c.l.b16 %v62
    %v322 = vunpack.c.h.b16 %v62
    %v323 = vunpack.c.l.b16 %v63
    %v324 = vunpack.c.h.b16 %v63
    %v325 = vunpack.c.l.b16 %v64
    %v326 = vunpack.c.h.b16 %v64
    %v327 = vunpack.c.l.b16 %v65
    %v328 = vunpack.c.h.b16 %v65
    %v329 = vunpack.c.l.b16 %v66
    %v330 = vunpack.c.h.b16 %v66
    %v331 = vunpack.c.l.b16 %v67
    %v332 = vunpack.c.h.b16 %v67
    %v333 = vunpack.c.l.b16 %v68
    %v334 = vunpack.c.h.b16 %v68
    %v335 = vunpack.c.l.b16 %v69
    %v336 = vunpack.c.h.b16 %v69
    %v337 = vunpack.c.l.b16 %v70
    %v338 = vunpack.c.h.b16 %v70
    %v339 = vunpack.c.l.b16 %v71
    %v340 = vunpack.c.h.b16 %v71
    %v341 = vunpack.c.l.b16 %v72
    %v342 = vunpack.c.h.b16 %v72
    %v343 = vunpack.c.l.b16 %v73
    %v344 = vunpack.c.h.b16 %v73
    %v345 = vunpack.c.l.b16 %v74
    %v346 = vunpack.c.h.b16 %v74
    %v347 = vunpack.c.l.b16 %v75
    %v348 = vunpack.c.h.b16 %v75
    %v349 = vunpack.c.l.b16 %v76
    %v350 = vunpack.c.h.b16 %v76
    %v351 = vunpack.c.l.b16 %v77
    %v352 = vunpack.c.h.b16 %v77
    %v353 = vunpack.c.l.b16 %v78
    %v354 = vunpack.c.h.b16 %v78
    %v355 = vunpack.c.l.b16 %v79
    %v356 = vunpack.c.h.b16 %v79
    %v357 = vunpack.c.l.b16 %v80
    %v358 = vunpack.c.h.b16 %v80
    %v359 = vunpack.c.l.b16 %v81
    %v360 = vunpack.c.h.b16 %v81
    %v361 = vunpack.c.l.b16 %v82
    %v362 = vunpack.c.h.b16 %v82
    %v363 = vunpack.c.l.b16 %v83
    %v364 = vunpack.c.h.b16 %v83
    %v365 = vunpack.c.l.b16 %v84
    %v366 = vunpack.c.h.b16 %v84
    %v367 = vunpack.c.l.b16 %v85
    %v368 = vunpack.c.h.b16 %v85
    %v369 = vunpack.c.l.b16 %v86
    %v370 = vunpack.c.h.b16 %v86
    %v371 = vunpack.c.l.b16 %v87
    %v372 = vunpack.c.h.b16 %v87
    %v373 = vunpack.c.l.b16 %v88
    %v374 = vunpack.c.h.b16 %v88
    %v375 = vunpack.c.l.b16 %v89
    %v376 = vunpack.c.h.b16 %v89
    %v377 = vunpack.c.l.b16 %v90
    %v378 = vunpack.c.h.b16 %v90
    %v379 = vunpack.c.l.b16 %v91
    %v380 = vunpack.c.h.b16 %v91
    %v381 = vunpack.c.l.b16 %v92
    %v382 = vunpack.c.h.b16 %v92
    %v383 = vunpack.c.l.b16 %v93
    %v384 = vunpack.c.h.b16 %v93
    %v385 = vunpack.c.l.b16 %v94
    %v386 = vunpack.c.h.b16 %v94
    %v387 = vunpack.c.l.b16 %v95
    %v388 = vunpack.c.h.b16 %v95
    %v389 = vunpack.c.l.b16 %v96
    %v390 = vunpack.c.h.b16 %v96
    %v391 = vunpack.c.l.b16 %v97
    %v392 = vunpack.c.h.b16 %v97
    %v393 = vunpack.c.l.b16 %v98
    %v394 = vunpack.c.h.b16 %v98
    %v395 = vunpack.c.l.b16 %v99
    %v396 = vunpack.c.h.b16 %v99
    %v397 = vunpack.c.l.b16 %v100
    %v398 = vunpack.c.h.b16 %v100
    %v399 = vunpack.c.l.b16 %v101
    %v400 = vunpack.c.h.b16 %v101
    %v401 = vunpack.c.l.b16 %v102
    %v402 = vunpack.c.h.b16 %v102
    %v403 = vunpack.c.l.b16 %v103
    %v404 = vunpack.c.h.b16 %v103
    %v405 = vunpack.c.l.b16 %v104
    %v406 = vunpack.c.h.b16 %v104
    %v407 = vunpack.c.l.b16 %v105
    %v408 = vunpack.c.h.b16 %v105
    %v409 = vunpack.c.l.b16 %v106
    %v410 = vunpack.c.h.b16 %v106
    %v411 = vunpack.c.l.b16 %v107
    %v412 = vunpack.c.h.b16 %v107
    %v413 = vunpack.c.l.b16 %v108
    %v414 = vunpack.c.h.b16 %v108
    %v415 = vunpack.c.l.b16 %v109
    %v416 = vunpack.c.h.b16 %v109
    %v417 = vunpack.c.l.b16 %v110
    %v418 = vunpack.c.h.b16 %v110
    %v419 = vunpack.c.l.b16 %v111
    %v420 = vunpack.c.h.b16 %v111
    %v421 = vunpack.c.l.b16 %v112
    %v422 = vunpack.c.h.b16 %v112
    %v423 = vunpack.c.l.b16 %v113
    %v424 = vunpack.c.h.b16 %v113
    %v425 = vunpack.c.l.b16 %v114
    %v426 = vunpack.c.h.b16 %v114
    %v427 = vunpack.c.l.b16 %v115
    %v428 = vunpack.c.h.b16 %v115
    %v429 = vunpack.c.l.b16 %v116
    %v430 = vunpack.c.h.b16 %v116
    %v431 = vunpack.c.l.b16 %v117
    %v432 = vunpack.c.h.b16 %v117
    %v433 = vunpack.c.l.b16 %v118
    %v434 = vunpack.c.h.b16 %v118
    %v435 = vunpack.c.l.b16 %v119
    %v436 = vunpack.c.h.b16 %v119
    %v437 = vunpack.c.l.b16 %v120
    %v438 = vunpack.c.h.b16 %v120
    %v439 = vunpack.c.l.b16 %v121
    %v440 = vunpack.c.h.b16 %v121
    %v441 = vunpack.c.l.b16 %v122
    %v442 = vunpack.c.h.b16 %v122
    %v443 = vunpack.c.l.b16 %v123
    %v444 = vunpack.c.h.b16 %v123
    %v445 = vunpack.c.l.b16 %v124
    %v446 = vunpack.c.h.b16 %v124
    %v447 = vunpack.c.l.b16 %v125
    %v448 = vunpack.c.h.b16 %v125
    %v449 = vunpack.c.l.b16 %v126
    %v450 = vunpack.c.h.b16 %v126
    %v451 = vunpack.c.l.b16 %v127
    %v452 = vunpack.c.h.b16 %v127
    %v453 = vunpack.c.l.b16 %v128
    %v454 = vunpack.c.h.b16 %v128
    %v455 = vunpack.c.l.b16 %v129
    %v456 = vunpack.c.h.b16 %v129
    %v457 = vunpack.c.l.b16 %v130
    %v458 = vunpack.c.h.b16 %v130
    %v459 = vunpack.c.l.b16 %v131
    %v460 = vunpack.c.h.b16 %v131
    %v461 = vunpack.c.l.b16 %v132
    %v462 = vunpack.c.h.b16 %v132
    %v463 = vunpack.c.l.b16 %v133
    %v464 = vunpack.c.h.b16 %v133
    %v465 = vunpack.c.l.b16 %v134
    %v466 = vunpack.c.h.b16 %v134
    %v467 = vunpack.c.l.b16 %v135
    %v468 = vunpack.c.h.b16 %v135
    %v469 = vunpack.c.l.b16 %v136
    %v470 = vunpack.c.h.b16 %v136
    %v471 = vunpack.c.l.b16 %v137
    %v472 = vunpack.c.h.b16 %v137
    %v473 = vunpack.c.l.b16 %v138
    %v474 = vunpack.c.h.b16 %v138
    %v475 = vunpack.c.l.b16 %v139
    %v476 = vunpack.c.h.b16 %v139
    %v477 = vunpack.c.l.b16 %v140
    %v478 = vunpack.c.h.b16 %v140
    %v479 = vunpack.c.l.b16 %v141
    %v480 = vunpack.c.h.b16 %v141
    %v481 = vunpack.c.l.b16 %v142
    %v482 = vunpack.c.h.b16 %v142
    %v483 = vunpack.c.l.b16 %v143
    %v484 = vunpack.c.h.b16 %v143
    %v485 = vunpack.c.l.b16 %v144
    %v486 = vunpack.c.h.b16 %v144
    %v487 = vunpack.c.l.b16 %v145
    %v488 = vunpack.c.h.b16 %v145
    %v489 = vunpack.c.l.b16 %v146
    %v490 = vunpack.c.h.b16 %v146
    %v491 = vunpack.c.l.b16 %v147
    %v492 = vunpack.c.h.b16 %v147
    %v493 = vunpack.c.l.b16 %v148
    %v494 = vunpack.c.h.b16 %v148
    %v495 = vunpack.c.l.b16 %v149
    %v496 = vunpack.c.h.b16 %v149
    %v497 = vunpack.c.l.b16 %v150
    %v498 = vunpack.c.h.b16 %v150
    %v499 = vunpack.c.l.b16 %v151
    %v500 = vunpack.c.h.b16 %v151
    %v501 = vunpack.c.l.b16 %v152
    %v502 = vunpack.c.h.b16 %v152
    %v503 = vunpack.c.l.b16 %v153
    %v504 = vunpack.c.h.b16 %v153
    %v505 = vunpack.c.l.b16 %v154
    %v506 = vunpack.c.h.b16 %v154
    %v507 = vunpack.c.l.b16 %v155
    %v508 = vunpack.c.h.b16 %v155
    %v509 = vunpack.c.l.b16 %v156
    %v510 = vunpack.c.h.b16 %v156
    %v511 = vunpack.c.l.b16 %v157
    %v512 = vunpack.c.h.b16 %v157
    %v513 = vunpack.c.l.b16 %v158
    %v514 = vunpack.c.h.b16 %v158
    %v515 = vunpack.c.l.b16 %v159
    %v516 = vunpack.c.h.b16 %v159
    %v517 = vunpack.c.l.b16 %v160
    %v518 = vunpack.c.h.b16 %v160
    %v519 = vunpack.c.l.b16 %v161
    %v520 = vunpack.c.h.b16 %v161
    %v521 = vunpack.c.l.b16 %v162
    %v522 = vunpack.c.h.b16 %v162
    %v523 = vunpack.c.l.b16 %v163
    %v524 = vunpack.c.h.b16 %v163
    %v525 = vunpack.c.l.b16 %v164
    %v526 = vunpack.c.h.b16 %v164
    %v527 = vunpack.c.l.b16 %v165
    %v528 = vunpack.c.h.b16 %v165
    %v529 = vunpack.c.l.b16 %v166
    %v530 = vunpack.c.h.b16 %v166
    %v531 = vunpack.c.l.b16 %v167
    %v532 = vunpack.c.h.b16 %v167
    %v533 = vunpack.c.l.b16 %v168
    %v534 = vunpack.c.h.b16 %v168
    %v535 = vunpack.c.l.b16 %v169
    %v536 = vunpack.c.h.b16 %v169
    %v537 = vunpack.c.l.b16 %v170
    %v538 = vunpack.c.h.b16 %v170
    %v539 = vunpack.c.l.b16 %v171
    %v540 = vunpack.c.h.b16 %v171
    %v541 = vunpack.c.l.b16 %v172
    %v542 = vunpack.c.h.b16 %v172
    %v543 = vunpack.c.l.b16 %v173
    %v544 = vunpack.c.h.b16 %v173
    %v545 = vunpack.c.l.b16 %v174
    %v546 = vunpack.c.h.b16 %v174
    %v547 = vunpack.c.l.b16 %v175
    %v548 = vunpack.c.h.b16 %v175
    %v549 = vunpack.c.l.b16 %v176
    %v550 = vunpack.c.h.b16 %v176
    %v551 = vunpack.c.l.b16 %v177
    %v552 = vunpack.c.h.b16 %v177
    %v553 = vunpack.c.l.b16 %v178
    %v554 = vunpack.c.h.b16 %v178
    %v555 = vunpack.c.l.b16 %v179
    %v556 = vunpack.c.h.b16 %v179
    %v557 = vunpack.c.l.b16 %v180
    %v558 = vunpack.c.h.b16 %v180
    %v559 = vunpack.c.l.b16 %v181
    %v560 = vunpack.c.h.b16 %v181
    %v561 = vunpack.c.l.b16 %v182
    %v562 = vunpack.c.h.b16 %v182
    %v563 = vunpack.c.l.b16 %v183
    %v564 = vunpack.c.h.b16 %v183
    %v565 = vunpack.c.l.b16 %v184
    %v566 = vunpack.c.h.b16 %v184
    %v567 = vunpack.c.l.b16 %v185
    %v568 = vunpack.c.h.b16 %v185
    %v569 = vunpack.c.l.b16 %v186
    %v570 = vunpack.c.h.b16 %v186
    %v571 = vpack.c.b16 %v323, %v315
    %v572 = vpack.c.b16 %v324, %v316
    %v573 = vpack.c.b16 %v325, %v317
    %v574 = vpack.c.b16 %v326, %v318
    %v575 = vpack.c.b16 %v327, %v319
    %v576 = vpack.c.b16 %v328, %v320
    %v577 = vpack.c.b16 %v329, %v321
    %v578 = vpack.c.b16 %v330, %v322
    %v579 = vpack.c.b16 %v339, %v331
    %v580 = vpack.c.b16 %v340, %v332
    %v581 = vpack.c.b16 %v341, %v333
    %v582 = vpack.c.b16 %v342, %v334
    %v583 = vpack.c.b16 %v343, %v335
    %v584 = vpack.c.b16 %v344, %v336
    %v585 = vpack.c.b16 %v345, %v337
    %v586 = vpack.c.b16 %v346, %v338
    %v587 = vpack.c.b16 %v355, %v347
    %v588 = vpack.c.b16 %v356, %v348
    %v589 = vpack.c.b16 %v357, %v349
    %v590 = vpack.c.b16 %v358, %v350
    %v591 = vpack.c.b16 %v359, %v351
    %v592 = vpack.c.b16 %v360, %v352
    %v593 = vpack.c.b16 %v361, %v353
    %v594 = vpack.c.b16 %v362, %v354
    %v595 = vpack.c.b16 %v371, %v363
    %v596 = vpack.c.b16 %v372, %v364
    %v597 = vpack.c.b16 %v373, %v365
    %v598 = vpack.c.b16 %v374, %v366
    %v599 = vpack.c.b16 %v375, %v367
    %v600 = vpack.c.b16 %v376, %v368
    %v601 = vpack.c.b16 %v377, %v369
    %v602 = vpack.c.b16 %v378, %v370
    %v603 = vpack.c.b16 %v387, %v379
    %v604 = vpack.c.b16 %v388, %v380
    %v605 = vpack.c.b16 %v389, %v381
    %v606 = vpack.c.b16 %v390, %v382
    %v607 = vpack.c.b16 %v391, %v383
    %v608 = vpack.c.b16 %v392, %v384
    %v609 = vpack.c.b16 %v393, %v385
    %v610 = vpack.c.b16 %v394, %v386
    %v611 = vpack.c.b16 %v403, %v395
    %v612 = vpack.c.b16 %v404, %v396
    %v613 = vpack.c.b16 %v405, %v397
    %v614 = vpack.c.b16 %v406, %v398
    %v615 = vpack.c.b16 %v407, %v399
    %v616 = vpack.c.b16 %v408, %v400
    %v617 = vpack.c.b16 %v409, %v401
    %v618 = vpack.c.b16 %v410, %v402
    %v619 = vpack.c.b16 %v419, %v411
    %v620 = vpack.c.b16 %v420, %v412
    %v621 = vpack.c.b16 %v421, %v413
    %v622 = vpack.c.b16 %v422, %v414
    %v623 = vpack.c.b16 %v423, %v415
    %v624 = vpack.c.b16 %v424, %v416
    %v625 = vpack.c.b16 %v425, %v417
    %v626 = vpack.c.b16 %v426, %v418
    %v627 = vpack.c.b16 %v435, %v427
    %v628 = vpack.c.b16 %v436, %v428
    %v629 = vpack.c.b16 %v437, %v429
    %v630 = vpack.c.b16 %v438, %v430
    %v631 = vpack.c.b16 %v439, %v431
    %v632 = vpack.c.b16 %v440, %v432
    %v633 = vpack.c.b16 %v441, %v433
    %v634 = vpack.c.b16 %v442, %v434
    %v635 = vpack.c.b16 %v451, %v443
    %v636 = vpack.c.b16 %v452, %v444
    %v637 = vpack.c.b16 %v453, %v445
    %v638 = vpack.c.b16 %v454, %v446
    %v639 = vpack.c.b16 %v455, %v447
    %v640 = vpack.c.b16 %v456, %v448
    %v641 = vpack.c.b16 %v457, %v449
    %v642 = vpack.c.b16 %v458, %v450
    %v643 = vpack.c.b16 %v467, %v459
    %v644 = vpack.c.b16 %v468, %v460
    %v645 = vpack.c.b16 %v469, %v461
    %v646 = vpack.c.b16 %v470, %v462
    %v647 = vpack.c.b16 %v471, %v463
    %v648 = vpack.c.b16 %v472, %v464
    %v649 = vpack.c.b16 %v473, %v465
    %v650 = vpack.c.b16 %v474, %v466
    %v651 = vpack.c.b16 %v483, %v475
    %v652 = vpack.c.b16 %v484, %v476
    %v653 = vpack.c.b16 %v485, %v477
    %v654 = vpack.c.b16 %v486, %v478
    %v655 = vpack.c.b16 %v487, %v479
    %v656 = vpack.c.b16 %v488, %v480
    %v657 = vpack.c.b16 %v489, %v481
    %v658 = vpack.c.b16 %v490, %v482
    %v659 = vpack.c.b16 %v499, %v491
    %v660 = vpack.c.b16 %v500, %v492
    %v661 = vpack.c.b16 %v501, %v493
    %v662 = vpack.c.b16 %v502, %v494
    %v663 = vpack.c.b16 %v503, %v495
    %v664 = vpack.c.b16 %v504, %v496
    %v665 = vpack.c.b16 %v505, %v497
    %v666 = vpack.c.b16 %v506, %v498
    %v667 = vpack.c.b16 %v515, %v507
    %v668 = vpack.c.b16 %v516, %v508
    %v669 = vpack.c.b16 %v517, %v509
    %v670 = vpack.c.b16 %v518, %v510
    %v671 = vpack.c.b16 %v519, %v511
    %v672 = vpack.c.b16 %v520, %v512
    %v673 = vpack.c.b16 %v521, %v513
    %v674 = vpack.c.b16 %v522, %v514
    %v675 = vpack.c.b16 %v531, %v523
    %v676 = vpack.c.b16 %v532, %v524
    %v677 = vpack.c.b16 %v533, %v525
    %v678 = vpack.c.b16 %v534, %v526
    %v679 = vpack.c.b16 %v535, %v527
    %v680 = vpack.c.b16 %v536, %v528
    %v681 = vpack.c.b16 %v537, %v529
    %v682 = vpack.c.b16 %v538, %v530
    %v683 = vpack.c.b16 %v547, %v539
    %v684 = vpack.c.b16 %v548, %v540
    %v685 = vpack.c.b16 %v549, %v541
    %v686 = vpack.c.b16 %v550, %v542
    %v687 = vpack.c.b16 %v551, %v543
    %v688 = vpack.c.b16 %v552, %v544
    %v689 = vpack.c.b16 %v553, %v545
    %v690 = vpack.c.b16 %v554, %v546
    %v691 = vpack.c.b16 %v563, %v555
    %v692 = vpack.c.b16 %v564, %v556
    %v693 = vpack.c.b16 %v565, %v557
    %v694 = vpack.c.b16 %v566, %v558
    %v695 = vpack.c.b16 %v567, %v559
    %v696 = vpack.c.b16 %v568, %v560
    %v697 = vpack.c.b16 %v569, %v561
    %v698 = vpack.c.b16 %v570, %v562
    %827 = vmatprep.subr.bf16.mxu0 %v628
    %828 = vmatpush1.bf16.msra.mxu0 %v627
    %829 = vmatprep.subr.bf16.mxu0 %v620
    %830 = vmatpush1.bf16.msra.mxu0 %v619
    %831 = vmatprep.subr.bf16.mxu0 %v612
    %832 = vmatpush1.bf16.msra.mxu0 %v611
    %833 = vmatprep.subr.bf16.mxu0 %v604
    %834 = vmatpush1.bf16.msra.mxu0 %v603
    %835 = vmatprep.subr.bf16.mxu0 %v596
    %836 = vmatpush1.bf16.msra.mxu0 %v595
    %837 = vmatprep.subr.bf16.mxu0 %v588
    %838 = vmatpush1.bf16.msra.mxu0 %v587
    %839 = vmatprep.subr.bf16.mxu0 %v580
    %840 = vmatpush1.bf16.msra.mxu0 %v579
    %841 = vmatprep.subr.bf16.mxu0 %v572
    %842 = vmatpush1.bf16.msra.mxu0 %v571
    %843 = vmatprep.subr.bf16.mxu0 %v692
    %844 = vmatpush2.bf16.msra.mxu0 %v691
    %845 = vmatprep.subr.bf16.mxu0 %v684
    %846 = vmatpush2.bf16.msra.mxu0 %v683
    %847 = vmatprep.subr.bf16.mxu0 %v676
    %848 = vmatpush2.bf16.msra.mxu0 %v675
    %849 = vmatprep.subr.bf16.mxu0 %v668
    %850 = vmatpush2.bf16.msra.mxu0 %v667
    %851 = vmatprep.subr.bf16.mxu0 %v660
    %852 = vmatpush2.bf16.msra.mxu0 %v659
    %853 = vmatprep.subr.bf16.mxu0 %v652
    %854 = vmatpush2.bf16.msra.mxu0 %v651
    %855 = vmatprep.subr.bf16.mxu0 %v644
    %856 = vmatpush2.bf16.msra.mxu0 %v643
    %857 = vmatprep.subr.bf16.mxu0 %v636
    %858 = vmatpush2.bf16.msra.mxu0 %v635
    %859 = vmatprep.mubr.bf16.mxu0 %v58
    %860 = vmatmul.mubr.bf16.gmra.mxu0 %v57
    %v861 = vpop.f32.mrf.mxu0
    %v862 = vadd.f32 0.0, %v861
    %v863 = vpop.f32.mrf.mxu0
    %v864 = vadd.f32 0.0, %v863
    %v865 = vpop.f32.mrf.mxu0
    %v866 = vpop.f32.mrf.mxu0
    %867 = vdwg.mxu0
    %868 = vmatprep.subr.bf16.mxu0 %v630
    %869 = vmatpush1.bf16.msra.mxu0 %v629
    %870 = vmatprep.subr.bf16.mxu0 %v622
    %871 = vmatpush1.bf16.msra.mxu0 %v621
    %872 = vmatprep.subr.bf16.mxu0 %v614
    %873 = vmatpush1.bf16.msra.mxu0 %v613
    %874 = vmatprep.subr.bf16.mxu0 %v606
    %875 = vmatpush1.bf16.msra.mxu0 %v605
    %876 = vmatprep.subr.bf16.mxu0 %v598
    %877 = vmatpush1.bf16.msra.mxu0 %v597
    %878 = vmatprep.subr.bf16.mxu0 %v590
    %879 = vmatpush1.bf16.msra.mxu0 %v589
    %880 = vmatprep.subr.bf16.mxu0 %v582
    %881 = vmatpush1.bf16.msra.mxu0 %v581
    %882 = vmatprep.subr.bf16.mxu0 %v574
    %883 = vmatpush1.bf16.msra.mxu0 %v573
    %884 = vmatprep.subr.bf16.mxu0 %v694
    %885 = vmatpush2.bf16.msra.mxu0 %v693
    %886 = vmatprep.subr.bf16.mxu0 %v686
    %887 = vmatpush2.bf16.msra.mxu0 %v685
    %888 = vmatprep.subr.bf16.mxu0 %v678
    %889 = vmatpush2.bf16.msra.mxu0 %v677
    %890 = vmatprep.subr.bf16.mxu0 %v670
    %891 = vmatpush2.bf16.msra.mxu0 %v669
    %892 = vmatprep.subr.bf16.mxu0 %v662
    %893 = vmatpush2.bf16.msra.mxu0 %v661
    %894 = vmatprep.subr.bf16.mxu0 %v654
    %895 = vmatpush2.bf16.msra.mxu0 %v653
    %896 = vmatprep.subr.bf16.mxu0 %v646
    %897 = vmatpush2.bf16.msra.mxu0 %v645
    %898 = vmatprep.subr.bf16.mxu0 %v638
    %899 = vmatpush2.bf16.msra.mxu0 %v637
    %900 = vmatprep.mubr.bf16.mxu0 %v58
    %901 = vmatmul.mubr.bf16.gmra.mxu0 %v57
    %v902 = vpop.f32.mrf.mxu0
    %v903 = vadd.f32 0.0, %v902
    %v904 = vpop.f32.mrf.mxu0
    %v905 = vadd.f32 0.0, %v904
    %v906 = vpop.f32.mrf.mxu0
    %v907 = vpop.f32.mrf.mxu0
    %908 = vdwg.mxu0
    %909 = vmatprep.subr.bf16.mxu0 %v632
    %910 = vmatpush1.bf16.msra.mxu0 %v631
    %911 = vmatprep.subr.bf16.mxu0 %v624
    %912 = vmatpush1.bf16.msra.mxu0 %v623
    %913 = vmatprep.subr.bf16.mxu0 %v616
    %914 = vmatpush1.bf16.msra.mxu0 %v615
    %915 = vmatprep.subr.bf16.mxu0 %v608
    %916 = vmatpush1.bf16.msra.mxu0 %v607
    %917 = vmatprep.subr.bf16.mxu0 %v600
    %918 = vmatpush1.bf16.msra.mxu0 %v599
    %919 = vmatprep.subr.bf16.mxu0 %v592
    %920 = vmatpush1.bf16.msra.mxu0 %v591
    %921 = vmatprep.subr.bf16.mxu0 %v584
    %922 = vmatpush1.bf16.msra.mxu0 %v583
    %923 = vmatprep.subr.bf16.mxu0 %v576
    %924 = vmatpush1.bf16.msra.mxu0 %v575
    %925 = vmatprep.subr.bf16.mxu0 %v696
    %926 = vmatpush2.bf16.msra.mxu0 %v695
    %927 = vmatprep.subr.bf16.mxu0 %v688
    %928 = vmatpush2.bf16.msra.mxu0 %v687
    %929 = vmatprep.subr.bf16.mxu0 %v680
    %930 = vmatpush2.bf16.msra.mxu0 %v679
    %931 = vmatprep.subr.bf16.mxu0 %v672
    %932 = vmatpush2.bf16.msra.mxu0 %v671
    %933 = vmatprep.subr.bf16.mxu0 %v664
    %934 = vmatpush2.bf16.msra.mxu0 %v663
    %935 = vmatprep.subr.bf16.mxu0 %v656
    %936 = vmatpush2.bf16.msra.mxu0 %v655
    %937 = vmatprep.subr.bf16.mxu0 %v648
    %938 = vmatpush2.bf16.msra.mxu0 %v647
    %939 = vmatprep.subr.bf16.mxu0 %v640
    %940 = vmatpush2.bf16.msra.mxu0 %v639
    %941 = vmatprep.mubr.bf16.mxu0 %v58
    %942 = vmatmul.mubr.bf16.gmra.mxu0 %v57
    %v943 = vpop.f32.mrf.mxu0
    %v944 = vadd.f32 0.0, %v943
    %v945 = vpop.f32.mrf.mxu0
    %v946 = vadd.f32 0.0, %v945
    %v947 = vpop.f32.mrf.mxu0
    %v948 = vpop.f32.mrf.mxu0
    %949 = vdwg.mxu0
    %950 = vmatprep.subr.bf16.mxu0 %v634
    %951 = vmatpush1.bf16.msra.mxu0 %v633
    %952 = vmatprep.subr.bf16.mxu0 %v626
    %953 = vmatpush1.bf16.msra.mxu0 %v625
    %954 = vmatprep.subr.bf16.mxu0 %v618
    %955 = vmatpush1.bf16.msra.mxu0 %v617
    %956 = vmatprep.subr.bf16.mxu0 %v610
    %957 = vmatpush1.bf16.msra.mxu0 %v609
    %958 = vmatprep.subr.bf16.mxu0 %v602
    %959 = vmatpush1.bf16.msra.mxu0 %v601
    %960 = vmatprep.subr.bf16.mxu0 %v594
    %961 = vmatpush1.bf16.msra.mxu0 %v593
    %962 = vmatprep.subr.bf16.mxu0 %v586
    %963 = vmatpush1.bf16.msra.mxu0 %v585
    %964 = vmatprep.subr.bf16.mxu0 %v578
    %965 = vmatpush1.bf16.msra.mxu0 %v577
    %966 = vmatprep.subr.bf16.mxu0 %v698
    %967 = vmatpush2.bf16.msra.mxu0 %v697
    %968 = vmatprep.subr.bf16.mxu0 %v690
    %969 = vmatpush2.bf16.msra.mxu0 %v689
    %970 = vmatprep.subr.bf16.mxu0 %v682
    %971 = vmatpush2.bf16.msra.mxu0 %v681
    %972 = vmatprep.subr.bf16.mxu0 %v674
    %973 = vmatpush2.bf16.msra.mxu0 %v673
    %974 = vmatprep.subr.bf16.mxu0 %v666
    %975 = vmatpush2.bf16.msra.mxu0 %v665
    %976 = vmatprep.subr.bf16.mxu0 %v658
    %977 = vmatpush2.bf16.msra.mxu0 %v657
    %978 = vmatprep.subr.bf16.mxu0 %v650
    %979 = vmatpush2.bf16.msra.mxu0 %v649
    %980 = vmatprep.subr.bf16.mxu0 %v642
    %981 = vmatpush2.bf16.msra.mxu0 %v641
    %982 = vmatprep.mubr.bf16.mxu0 %v58
    %983 = vmatmul.mubr.bf16.gmra.mxu0 %v57
    %v984 = vpop.f32.mrf.mxu0
    %v985 = vadd.f32 0.0, %v984
    %v986 = vpop.f32.mrf.mxu0
    %v987 = vadd.f32 0.0, %v986
    %v988 = vpop.f32.mrf.mxu0
    %v989 = vpop.f32.mrf.mxu0
    %990 = vdwg.mxu0
    %v991 = vpack.c.bf16 %v862, %v862
    %v992 = vpack.c.bf16 %v864, %v864
    %v993 = vpack.c.bf16 %v903, %v903
    %v994 = vpack.c.bf16 %v905, %v905
    %v995 = vpack.c.bf16 %v944, %v944
    %v996 = vpack.c.bf16 %v946, %v946
    %v997 = vpack.c.bf16 %v985, %v985
    %v998 = vpack.c.bf16 %v987, %v987
    %v999 = vld [vmem:[%s2] sm:$0xff]
    %v1001 = vcombine.high %v999, %v999
    %v1003 = vunpack.c.l.s4 1966171168
    %v1004 = vunpack.c.0.s8 %v1003
    %v1005 = vlaneseq
    %v1006 = vshrl.u32 %v1005, 7
    %v1007 = vsub.s32 %v1004, %v1006
    %v1008 = vrot.slane %v999, %v1007
    %v1010 = vunpack.c.l.s4 1966171168
    %v1011 = vunpack.c.0.s8 %v1010
    %v1012 = vlaneseq
    %v1013 = vshrl.u32 %v1012, 7
    %v1014 = vsub.s32 %v1011, %v1013
    %v1015 = vrot.slane %v1001, %v1014
    %v1016 = vcombine.high %v1008, %v1008
    %v1017 = vcombine.high %v1015, %v1015
    %v1019 = vunpack.c.l.s4 1966171168
    %v1020 = vunpack.c.0.s8 %v1019
    %v1021 = vlaneseq
    %v1022 = vshrl.u32 %v1021, 7
    %v1023 = vsub.s32 %v1020, %v1022
    %v1024 = vrot.slane %v1008, %v1023
    %v1026 = vunpack.c.l.s4 1966171168
    %v1027 = vunpack.c.0.s8 %v1026
    %v1028 = vlaneseq
    %v1029 = vshrl.u32 %v1028, 7
    %v1030 = vsub.s32 %v1027, %v1029
    %v1031 = vrot.slane %v1015, %v1030
    %v1033 = vunpack.c.l.s4 1966171168
    %v1034 = vunpack.c.0.s8 %v1033
    %v1035 = vlaneseq
    %v1036 = vshrl.u32 %v1035, 7
    %v1037 = vsub.s32 %v1034, %v1036
    %v1038 = vrot.slane %v1016, %v1037
    %v1040 = vunpack.c.l.s4 1966171168
    %v1041 = vunpack.c.0.s8 %v1040
    %v1042 = vlaneseq
    %v1043 = vshrl.u32 %v1042, 7
    %v1044 = vsub.s32 %v1041, %v1043
    %v1045 = vrot.slane %v1017, %v1044
    %v1046 = vcombine.high %v1024, %v1024
    %v1047 = vcombine.high %v1031, %v1031
    %v1048 = vcombine.high %v1038, %v1038
    %v1049 = vcombine.high %v1045, %v1045
    %v1051 = vpack.i.b16 %v1024, %v1024
    %v1053 = vlaneseq
    %v1054 = vshrl.u32 %v1053, 7
    %v1055 = vsub.s32 0, %v1054
    %v1056 = vrot.slane %v1051, %v1055
    %v1058 = vpack.i.b16 %v1038, %v1038
    %v1060 = vlaneseq
    %v1061 = vshrl.u32 %v1060, 7
    %v1062 = vsub.s32 0, %v1061
    %v1063 = vrot.slane %v1058, %v1062
    %v1065 = vpack.i.b16 %v1046, %v1046
    %v1067 = vlaneseq
    %v1068 = vshrl.u32 %v1067, 7
    %v1069 = vsub.s32 0, %v1068
    %v1070 = vrot.slane %v1065, %v1069
    %v1072 = vpack.i.b16 %v1048, %v1048
    %v1074 = vlaneseq
    %v1075 = vshrl.u32 %v1074, 7
    %v1076 = vsub.s32 0, %v1075
    %v1077 = vrot.slane %v1072, %v1076
    %v1079 = vpack.i.b16 %v1031, %v1031
    %v1081 = vlaneseq
    %v1082 = vshrl.u32 %v1081, 7
    %v1083 = vsub.s32 0, %v1082
    %v1084 = vrot.slane %v1079, %v1083
    %v1086 = vpack.i.b16 %v1045, %v1045
    %v1088 = vlaneseq
    %v1089 = vshrl.u32 %v1088, 7
    %v1090 = vsub.s32 0, %v1089
    %v1091 = vrot.slane %v1086, %v1090
    %v1093 = vpack.i.b16 %v1047, %v1047
    %v1095 = vlaneseq
    %v1096 = vshrl.u32 %v1095, 7
    %v1097 = vsub.s32 0, %v1096
    %v1098 = vrot.slane %v1093, %v1097
    %v1100 = vpack.i.b16 %v1049, %v1049
    %v1102 = vlaneseq
    %v1103 = vshrl.u32 %v1102, 7
    %v1104 = vsub.s32 0, %v1103
    %v1105 = vrot.slane %v1100, %v1104
    %v1106 = vadd.bf16 %v991, %v1056
    %v1107 = vadd.bf16 %v992, %v1063
    %v1108 = vadd.bf16 %v993, %v1070
    %v1109 = vadd.bf16 %v994, %v1077
    %v1110 = vadd.bf16 %v995, %v1084
    %v1111 = vadd.bf16 %v996, %v1091
    %v1112 = vadd.bf16 %v997, %v1098
    %v1113 = vadd.bf16 %v998, %v1105
    %v1114 = vmax.bf16 %v1106, 0
    %v1115 = vmax.bf16 %v1107, 0
    %v1116 = vmax.bf16 %v1108, 0
    %v1117 = vmax.bf16 %v1109, 0
    %v1118 = vmax.bf16 %v1110, 0
    %v1119 = vmax.bf16 %v1111, 0
    %v1120 = vmax.bf16 %v1112, 0
    %v1121 = vmax.bf16 %v1113, 0
    %v1122 = vmin.bf16 %v1114, 1065369472
    %v1123 = vmin.bf16 %v1115, 1065369472
    %v1124 = vmin.bf16 %v1116, 1065369472
    %v1125 = vmin.bf16 %v1117, 1065369472
    %v1126 = vmin.bf16 %v1118, 1065369472
    %v1127 = vmin.bf16 %v1119, 1065369472
    %v1128 = vmin.bf16 %v1120, 1065369472
    %v1129 = vmin.bf16 %v1121, 1065369472
    %v1130 = vld [vmem:[%s3] sm:$0xf]
    %v1131 = vld [vmem:[%s3 + $0x4] sm:$0xf]
    %v1132 = vld [vmem:[%s3 + $0x8] sm:$0xf]
    %v1133 = vld [vmem:[%s3 + $0xc] sm:$0xf]
    %v1134 = vld [vmem:[%s3 + $0x10] sm:$0xf]
    %v1135 = vld [vmem:[%s3 + $0x14] sm:$0xf]
    %v1136 = vld [vmem:[%s3 + $0x18] sm:$0xf]
    %v1137 = vld [vmem:[%s3 + $0x1c] sm:$0xf]
    %v1138 = vld [vmem:[%s3 + $0x20] sm:$0xf]
    %v1139 = vld [vmem:[%s3 + $0x24] sm:$0xf]
    %v1140 = vld [vmem:[%s3 + $0x28] sm:$0xf]
    %v1141 = vld [vmem:[%s3 + $0x2c] sm:$0xf]
    %v1142 = vld [vmem:[%s3 + $0x30] sm:$0xf]
    %v1143 = vld [vmem:[%s3 + $0x34] sm:$0xf]
    %v1144 = vld [vmem:[%s3 + $0x38] sm:$0xf]
    %v1145 = vld [vmem:[%s3 + $0x3c] sm:$0xf]
    %v1146 = vld [vmem:[%s3 + $0x40] sm:$0xf]
    %v1147 = vld [vmem:[%s3 + $0x44] sm:$0xf]
    %v1148 = vld [vmem:[%s3 + $0x48] sm:$0xf]
    %v1149 = vld [vmem:[%s3 + $0x4c] sm:$0xf]
    %v1150 = vld [vmem:[%s3 + $0x50] sm:$0xf]
    %v1151 = vld [vmem:[%s3 + $0x54] sm:$0xf]
    %v1152 = vld [vmem:[%s3 + $0x58] sm:$0xf]
    %v1153 = vld [vmem:[%s3 + $0x5c] sm:$0xf]
    %v1154 = vld [vmem:[%s3 + $0x60] sm:$0xf]
    %v1155 = vld [vmem:[%s3 + $0x64] sm:$0xf]
    %v1156 = vld [vmem:[%s3 + $0x68] sm:$0xf]
    %v1157 = vld [vmem:[%s3 + $0x6c] sm:$0xf]
    %v1158 = vld [vmem:[%s3 + $0x70] sm:$0xf]
    %v1159 = vld [vmem:[%s3 + $0x74] sm:$0xf]
    %v1160 = vld [vmem:[%s3 + $0x78] sm:$0xf]
    %v1161 = vld [vmem:[%s3 + $0x7c] sm:$0xf]
    %v1162 = vld [vmem:[%s3 + $0x80] sm:$0xf]
    %v1163 = vld [vmem:[%s3 + $0x84] sm:$0xf]
    %v1164 = vld [vmem:[%s3 + $0x88] sm:$0xf]
    %v1165 = vld [vmem:[%s3 + $0x8c] sm:$0xf]
    %v1166 = vld [vmem:[%s3 + $0x90] sm:$0xf]
    %v1167 = vld [vmem:[%s3 + $0x94] sm:$0xf]
    %v1168 = vld [vmem:[%s3 + $0x98] sm:$0xf]
    %v1169 = vld [vmem:[%s3 + $0x9c] sm:$0xf]
    %v1170 = vld [vmem:[%s3 + $0xa0] sm:$0xf]
    %v1171 = vld [vmem:[%s3 + $0xa4] sm:$0xf]
    %v1172 = vld [vmem:[%s3 + $0xa8] sm:$0xf]
    %v1173 = vld [vmem:[%s3 + $0xac] sm:$0xf]
    %v1174 = vld [vmem:[%s3 + $0xb0] sm:$0xf]
    %v1175 = vld [vmem:[%s3 + $0xb4] sm:$0xf]
    %v1176 = vld [vmem:[%s3 + $0xb8] sm:$0xf]
    %v1177 = vld [vmem:[%s3 + $0xbc] sm:$0xf]
    %v1178 = vld [vmem:[%s3 + $0xc0] sm:$0xf]
    %v1179 = vld [vmem:[%s3 + $0xc4] sm:$0xf]
    %v1180 = vld [vmem:[%s3 + $0xc8] sm:$0xf]
    %v1181 = vld [vmem:[%s3 + $0xcc] sm:$0xf]
    %v1182 = vld [vmem:[%s3 + $0xd0] sm:$0xf]
    %v1183 = vld [vmem:[%s3 + $0xd4] sm:$0xf]
    %v1184 = vld [vmem:[%s3 + $0xd8] sm:$0xf]
    %v1185 = vld [vmem:[%s3 + $0xdc] sm:$0xf]
    %v1186 = vld [vmem:[%s3 + $0xe0] sm:$0xf]
    %v1187 = vld [vmem:[%s3 + $0xe4] sm:$0xf]
    %v1188 = vld [vmem:[%s3 + $0xe8] sm:$0xf]
    %v1189 = vld [vmem:[%s3 + $0xec] sm:$0xf]
    %v1190 = vld [vmem:[%s3 + $0xf0] sm:$0xf]
    %v1191 = vld [vmem:[%s3 + $0xf4] sm:$0xf]
    %v1192 = vld [vmem:[%s3 + $0xf8] sm:$0xf]
    %v1193 = vld [vmem:[%s3 + $0xfc] sm:$0xf]
    %v1194 = vld [vmem:[%s3 + $0x100] sm:$0xf]
    %v1195 = vld [vmem:[%s3 + $0x104] sm:$0xf]
    %v1196 = vld [vmem:[%s3 + $0x108] sm:$0xf]
    %v1197 = vld [vmem:[%s3 + $0x10c] sm:$0xf]
    %v1198 = vld [vmem:[%s3 + $0x110] sm:$0xf]
    %v1199 = vld [vmem:[%s3 + $0x114] sm:$0xf]
    %v1200 = vld [vmem:[%s3 + $0x118] sm:$0xf]
    %v1201 = vld [vmem:[%s3 + $0x11c] sm:$0xf]
    %v1202 = vld [vmem:[%s3 + $0x120] sm:$0xf]
    %v1203 = vld [vmem:[%s3 + $0x124] sm:$0xf]
    %v1204 = vld [vmem:[%s3 + $0x128] sm:$0xf]
    %v1205 = vld [vmem:[%s3 + $0x12c] sm:$0xf]
    %v1206 = vld [vmem:[%s3 + $0x130] sm:$0xf]
    %v1207 = vld [vmem:[%s3 + $0x134] sm:$0xf]
    %v1208 = vld [vmem:[%s3 + $0x138] sm:$0xf]
    %v1209 = vld [vmem:[%s3 + $0x13c] sm:$0xf]
    %v1210 = vld [vmem:[%s3 + $0x140] sm:$0xf]
    %v1211 = vld [vmem:[%s3 + $0x144] sm:$0xf]
    %v1212 = vld [vmem:[%s3 + $0x148] sm:$0xf]
    %v1213 = vld [vmem:[%s3 + $0x14c] sm:$0xf]
    %v1214 = vld [vmem:[%s3 + $0x150] sm:$0xf]
    %v1215 = vld [vmem:[%s3 + $0x154] sm:$0xf]
    %v1216 = vld [vmem:[%s3 + $0x158] sm:$0xf]
    %v1217 = vld [vmem:[%s3 + $0x15c] sm:$0xf]
    %v1218 = vld [vmem:[%s3 + $0x160] sm:$0xf]
    %v1219 = vld [vmem:[%s3 + $0x164] sm:$0xf]
    %v1220 = vld [vmem:[%s3 + $0x168] sm:$0xf]
    %v1221 = vld [vmem:[%s3 + $0x16c] sm:$0xf]
    %v1222 = vld [vmem:[%s3 + $0x170] sm:$0xf]
    %v1223 = vld [vmem:[%s3 + $0x174] sm:$0xf]
    %v1224 = vld [vmem:[%s3 + $0x178] sm:$0xf]
    %v1225 = vld [vmem:[%s3 + $0x17c] sm:$0xf]
    %v1226 = vld [vmem:[%s3 + $0x180] sm:$0xf]
    %v1227 = vld [vmem:[%s3 + $0x184] sm:$0xf]
    %v1228 = vld [vmem:[%s3 + $0x188] sm:$0xf]
    %v1229 = vld [vmem:[%s3 + $0x18c] sm:$0xf]
    %v1230 = vld [vmem:[%s3 + $0x190] sm:$0xf]
    %v1231 = vld [vmem:[%s3 + $0x194] sm:$0xf]
    %v1232 = vld [vmem:[%s3 + $0x198] sm:$0xf]
    %v1233 = vld [vmem:[%s3 + $0x19c] sm:$0xf]
    %v1234 = vld [vmem:[%s3 + $0x1a0] sm:$0xf]
    %v1235 = vld [vmem:[%s3 + $0x1a4] sm:$0xf]
    %v1236 = vld [vmem:[%s3 + $0x1a8] sm:$0xf]
    %v1237 = vld [vmem:[%s3 + $0x1ac] sm:$0xf]
    %v1238 = vld [vmem:[%s3 + $0x1b0] sm:$0xf]
    %v1239 = vld [vmem:[%s3 + $0x1b4] sm:$0xf]
    %v1240 = vld [vmem:[%s3 + $0x1b8] sm:$0xf]
    %v1241 = vld [vmem:[%s3 + $0x1bc] sm:$0xf]
    %v1242 = vld [vmem:[%s3 + $0x1c0] sm:$0xf]
    %v1243 = vld [vmem:[%s3 + $0x1c4] sm:$0xf]
    %v1244 = vld [vmem:[%s3 + $0x1c8] sm:$0xf]
    %v1245 = vld [vmem:[%s3 + $0x1cc] sm:$0xf]
    %v1246 = vld [vmem:[%s3 + $0x1d0] sm:$0xf]
    %v1247 = vld [vmem:[%s3 + $0x1d4] sm:$0xf]
    %v1248 = vld [vmem:[%s3 + $0x1d8] sm:$0xf]
    %v1249 = vld [vmem:[%s3 + $0x1dc] sm:$0xf]
    %v1250 = vld [vmem:[%s3 + $0x1e0] sm:$0xf]
    %v1251 = vld [vmem:[%s3 + $0x1e4] sm:$0xf]
    %v1252 = vld [vmem:[%s3 + $0x1e8] sm:$0xf]
    %v1253 = vld [vmem:[%s3 + $0x1ec] sm:$0xf]
    %v1254 = vld [vmem:[%s3 + $0x1f0] sm:$0xf]
    %v1255 = vld [vmem:[%s3 + $0x1f4] sm:$0xf]
    %v1256 = vld [vmem:[%s3 + $0x1f8] sm:$0xf]
    %v1257 = vld [vmem:[%s3 + $0x1fc] sm:$0xf]
    %v1386 = vunpack.c.l.b16 %v1130
    %v1387 = vunpack.c.l.b16 %v1131
    %v1388 = vunpack.c.l.b16 %v1132
    %v1389 = vunpack.c.l.b16 %v1133
    %v1390 = vunpack.c.l.b16 %v1134
    %v1391 = vunpack.c.l.b16 %v1135
    %v1392 = vunpack.c.l.b16 %v1136
    %v1393 = vunpack.c.l.b16 %v1137
    %v1394 = vunpack.c.l.b16 %v1138
    %v1395 = vunpack.c.l.b16 %v1139
    %v1396 = vunpack.c.l.b16 %v1140
    %v1397 = vunpack.c.l.b16 %v1141
    %v1398 = vunpack.c.l.b16 %v1142
    %v1399 = vunpack.c.l.b16 %v1143
    %v1400 = vunpack.c.l.b16 %v1144
    %v1401 = vunpack.c.l.b16 %v1145
    %v1402 = vunpack.c.l.b16 %v1146
    %v1403 = vunpack.c.l.b16 %v1147
    %v1404 = vunpack.c.l.b16 %v1148
    %v1405 = vunpack.c.l.b16 %v1149
    %v1406 = vunpack.c.l.b16 %v1150
    %v1407 = vunpack.c.l.b16 %v1151
    %v1408 = vunpack.c.l.b16 %v1152
    %v1409 = vunpack.c.l.b16 %v1153
    %v1410 = vunpack.c.l.b16 %v1154
    %v1411 = vunpack.c.l.b16 %v1155
    %v1412 = vunpack.c.l.b16 %v1156
    %v1413 = vunpack.c.l.b16 %v1157
    %v1414 = vunpack.c.l.b16 %v1158
    %v1415 = vunpack.c.l.b16 %v1159
    %v1416 = vunpack.c.l.b16 %v1160
    %v1417 = vunpack.c.l.b16 %v1161
    %v1418 = vunpack.c.l.b16 %v1162
    %v1419 = vunpack.c.l.b16 %v1163
    %v1420 = vunpack.c.l.b16 %v1164
    %v1421 = vunpack.c.l.b16 %v1165
    %v1422 = vunpack.c.l.b16 %v1166
    %v1423 = vunpack.c.l.b16 %v1167
    %v1424 = vunpack.c.l.b16 %v1168
    %v1425 = vunpack.c.l.b16 %v1169
    %v1426 = vunpack.c.l.b16 %v1170
    %v1427 = vunpack.c.l.b16 %v1171
    %v1428 = vunpack.c.l.b16 %v1172
    %v1429 = vunpack.c.l.b16 %v1173
    %v1430 = vunpack.c.l.b16 %v1174
    %v1431 = vunpack.c.l.b16 %v1175
    %v1432 = vunpack.c.l.b16 %v1176
    %v1433 = vunpack.c.l.b16 %v1177
    %v1434 = vunpack.c.l.b16 %v1178
    %v1435 = vunpack.c.l.b16 %v1179
    %v1436 = vunpack.c.l.b16 %v1180
    %v1437 = vunpack.c.l.b16 %v1181
    %v1438 = vunpack.c.l.b16 %v1182
    %v1439 = vunpack.c.l.b16 %v1183
    %v1440 = vunpack.c.l.b16 %v1184
    %v1441 = vunpack.c.l.b16 %v1185
    %v1442 = vunpack.c.l.b16 %v1186
    %v1443 = vunpack.c.l.b16 %v1187
    %v1444 = vunpack.c.l.b16 %v1188
    %v1445 = vunpack.c.l.b16 %v1189
    %v1446 = vunpack.c.l.b16 %v1190
    %v1447 = vunpack.c.l.b16 %v1191
    %v1448 = vunpack.c.l.b16 %v1192
    %v1449 = vunpack.c.l.b16 %v1193
    %v1450 = vunpack.c.l.b16 %v1194
    %v1451 = vunpack.c.l.b16 %v1195
    %v1452 = vunpack.c.l.b16 %v1196
    %v1453 = vunpack.c.l.b16 %v1197
    %v1454 = vunpack.c.l.b16 %v1198
    %v1455 = vunpack.c.l.b16 %v1199
    %v1456 = vunpack.c.l.b16 %v1200
    %v1457 = vunpack.c.l.b16 %v1201
    %v1458 = vunpack.c.l.b16 %v1202
    %v1459 = vunpack.c.l.b16 %v1203
    %v1460 = vunpack.c.l.b16 %v1204
    %v1461 = vunpack.c.l.b16 %v1205
    %v1462 = vunpack.c.l.b16 %v1206
    %v1463 = vunpack.c.l.b16 %v1207
    %v1464 = vunpack.c.l.b16 %v1208
    %v1465 = vunpack.c.l.b16 %v1209
    %v1466 = vunpack.c.l.b16 %v1210
    %v1467 = vunpack.c.l.b16 %v1211
    %v1468 = vunpack.c.l.b16 %v1212
    %v1469 = vunpack.c.l.b16 %v1213
    %v1470 = vunpack.c.l.b16 %v1214
    %v1471 = vunpack.c.l.b16 %v1215
    %v1472 = vunpack.c.l.b16 %v1216
    %v1473 = vunpack.c.l.b16 %v1217
    %v1474 = vunpack.c.l.b16 %v1218
    %v1475 = vunpack.c.l.b16 %v1219
    %v1476 = vunpack.c.l.b16 %v1220
    %v1477 = vunpack.c.l.b16 %v1221
    %v1478 = vunpack.c.l.b16 %v1222
    %v1479 = vunpack.c.l.b16 %v1223
    %v1480 = vunpack.c.l.b16 %v1224
    %v1481 = vunpack.c.l.b16 %v1225
    %v1482 = vunpack.c.l.b16 %v1226
    %v1483 = vunpack.c.l.b16 %v1227
    %v1484 = vunpack.c.l.b16 %v1228
    %v1485 = vunpack.c.l.b16 %v1229
    %v1486 = vunpack.c.l.b16 %v1230
    %v1487 = vunpack.c.l.b16 %v1231
    %v1488 = vunpack.c.l.b16 %v1232
    %v1489 = vunpack.c.l.b16 %v1233
    %v1490 = vunpack.c.l.b16 %v1234
    %v1491 = vunpack.c.l.b16 %v1235
    %v1492 = vunpack.c.l.b16 %v1236
    %v1493 = vunpack.c.l.b16 %v1237
    %v1494 = vunpack.c.l.b16 %v1238
    %v1495 = vunpack.c.l.b16 %v1239
    %v1496 = vunpack.c.l.b16 %v1240
    %v1497 = vunpack.c.l.b16 %v1241
    %v1498 = vunpack.c.l.b16 %v1242
    %v1499 = vunpack.c.l.b16 %v1243
    %v1500 = vunpack.c.l.b16 %v1244
    %v1501 = vunpack.c.l.b16 %v1245
    %v1502 = vunpack.c.l.b16 %v1246
    %v1503 = vunpack.c.l.b16 %v1247
    %v1504 = vunpack.c.l.b16 %v1248
    %v1505 = vunpack.c.l.b16 %v1249
    %v1506 = vunpack.c.l.b16 %v1250
    %v1507 = vunpack.c.l.b16 %v1251
    %v1508 = vunpack.c.l.b16 %v1252
    %v1509 = vunpack.c.l.b16 %v1253
    %v1510 = vunpack.c.l.b16 %v1254
    %v1511 = vunpack.c.l.b16 %v1255
    %v1512 = vunpack.c.l.b16 %v1256
    %v1513 = vunpack.c.l.b16 %v1257
    %v1514 = vpack.c.b16 %v1387, %v1386
    %v1515 = vpack.c.b16 %v1389, %v1388
    %v1516 = vpack.c.b16 %v1391, %v1390
    %v1517 = vpack.c.b16 %v1393, %v1392
    %v1518 = vpack.c.b16 %v1395, %v1394
    %v1519 = vpack.c.b16 %v1397, %v1396
    %v1520 = vpack.c.b16 %v1399, %v1398
    %v1521 = vpack.c.b16 %v1401, %v1400
    %v1522 = vpack.c.b16 %v1403, %v1402
    %v1523 = vpack.c.b16 %v1405, %v1404
    %v1524 = vpack.c.b16 %v1407, %v1406
    %v1525 = vpack.c.b16 %v1409, %v1408
    %v1526 = vpack.c.b16 %v1411, %v1410
    %v1527 = vpack.c.b16 %v1413, %v1412
    %v1528 = vpack.c.b16 %v1415, %v1414
    %v1529 = vpack.c.b16 %v1417, %v1416
    %v1530 = vpack.c.b16 %v1419, %v1418
    %v1531 = vpack.c.b16 %v1421, %v1420
    %v1532 = vpack.c.b16 %v1423, %v1422
    %v1533 = vpack.c.b16 %v1425, %v1424
    %v1534 = vpack.c.b16 %v1427, %v1426
    %v1535 = vpack.c.b16 %v1429, %v1428
    %v1536 = vpack.c.b16 %v1431, %v1430
    %v1537 = vpack.c.b16 %v1433, %v1432
    %v1538 = vpack.c.b16 %v1435, %v1434
    %v1539 = vpack.c.b16 %v1437, %v1436
    %v1540 = vpack.c.b16 %v1439, %v1438
    %v1541 = vpack.c.b16 %v1441, %v1440
    %v1542 = vpack.c.b16 %v1443, %v1442
    %v1543 = vpack.c.b16 %v1445, %v1444
    %v1544 = vpack.c.b16 %v1447, %v1446
    %v1545 = vpack.c.b16 %v1449, %v1448
    %v1546 = vpack.c.b16 %v1451, %v1450
    %v1547 = vpack.c.b16 %v1453, %v1452
    %v1548 = vpack.c.b16 %v1455, %v1454
    %v1549 = vpack.c.b16 %v1457, %v1456
    %v1550 = vpack.c.b16 %v1459, %v1458
    %v1551 = vpack.c.b16 %v1461, %v1460
    %v1552 = vpack.c.b16 %v1463, %v1462
    %v1553 = vpack.c.b16 %v1465, %v1464
    %v1554 = vpack.c.b16 %v1467, %v1466
    %v1555 = vpack.c.b16 %v1469, %v1468
    %v1556 = vpack.c.b16 %v1471, %v1470
    %v1557 = vpack.c.b16 %v1473, %v1472
    %v1558 = vpack.c.b16 %v1475, %v1474
    %v1559 = vpack.c.b16 %v1477, %v1476
    %v1560 = vpack.c.b16 %v1479, %v1478
    %v1561 = vpack.c.b16 %v1481, %v1480
    %v1562 = vpack.c.b16 %v1483, %v1482
    %v1563 = vpack.c.b16 %v1485, %v1484
    %v1564 = vpack.c.b16 %v1487, %v1486
    %v1565 = vpack.c.b16 %v1489, %v1488
    %v1566 = vpack.c.b16 %v1491, %v1490
    %v1567 = vpack.c.b16 %v1493, %v1492
    %v1568 = vpack.c.b16 %v1495, %v1494
    %v1569 = vpack.c.b16 %v1497, %v1496
    %v1570 = vpack.c.b16 %v1499, %v1498
    %v1571 = vpack.c.b16 %v1501, %v1500
    %v1572 = vpack.c.b16 %v1503, %v1502
    %v1573 = vpack.c.b16 %v1505, %v1504
    %v1574 = vpack.c.b16 %v1507, %v1506
    %v1575 = vpack.c.b16 %v1509, %v1508
    %v1576 = vpack.c.b16 %v1511, %v1510
    %v1577 = vpack.c.b16 %v1513, %v1512
    %1642 = vmatprep.subr.bf16.mxu0 0
    %1643 = vmatpush1.bf16.msra.mxu0 %v1521
    %1644 = vmatprep.subr.bf16.mxu0 0
    %1645 = vmatpush1.bf16.msra.mxu0 %v1520
    %1646 = vmatprep.subr.bf16.mxu0 0
    %1647 = vmatpush1.bf16.msra.mxu0 %v1519
    %1648 = vmatprep.subr.bf16.mxu0 0
    %1649 = vmatpush1.bf16.msra.mxu0 %v1518
    %1650 = vmatprep.subr.bf16.mxu0 0
    %1651 = vmatpush1.bf16.msra.mxu0 %v1517
    %1652 = vmatprep.subr.bf16.mxu0 0
    %1653 = vmatpush1.bf16.msra.mxu0 %v1516
    %1654 = vmatprep.subr.bf16.mxu0 0
    %1655 = vmatpush1.bf16.msra.mxu0 %v1515
    %1656 = vmatprep.subr.bf16.mxu0 0
    %1657 = vmatpush1.bf16.msra.mxu0 %v1514
    %1658 = vmatprep.subr.bf16.mxu0 0
    %1659 = vmatpush2.bf16.msra.mxu0 %v1529
    %1660 = vmatprep.subr.bf16.mxu0 0
    %1661 = vmatpush2.bf16.msra.mxu0 %v1528
    %1662 = vmatprep.subr.bf16.mxu0 0
    %1663 = vmatpush2.bf16.msra.mxu0 %v1527
    %1664 = vmatprep.subr.bf16.mxu0 0
    %1665 = vmatpush2.bf16.msra.mxu0 %v1526
    %1666 = vmatprep.subr.bf16.mxu0 0
    %1667 = vmatpush2.bf16.msra.mxu0 %v1525
    %1668 = vmatprep.subr.bf16.mxu0 0
    %1669 = vmatpush2.bf16.msra.mxu0 %v1524
    %1670 = vmatprep.subr.bf16.mxu0 0
    %1671 = vmatpush2.bf16.msra.mxu0 %v1523
    %1672 = vmatprep.subr.bf16.mxu0 0
    %1673 = vmatpush2.bf16.msra.mxu0 %v1522
    %1674 = vmatprep.mubr.bf16.mxu0 %v1123
    %1675 = vmatmul.mubr.bf16.gmra.mxu0 %v1122
    %v1676 = vpop.f32.mrf.mxu0
    %v1677 = vadd.f32 0.0, %v1676
    %v1678 = vpop.f32.mrf.mxu0
    %v1679 = vpop.f32.mrf.mxu0
    %v1680 = vpop.f32.mrf.mxu0
    %1681 = vdwg.mxu0
    %1682 = vmatprep.subr.bf16.mxu0 0
    %1683 = vmatpush1.bf16.msra.mxu0 %v1537
    %1684 = vmatprep.subr.bf16.mxu0 0
    %1685 = vmatpush1.bf16.msra.mxu0 %v1536
    %1686 = vmatprep.subr.bf16.mxu0 0
    %1687 = vmatpush1.bf16.msra.mxu0 %v1535
    %1688 = vmatprep.subr.bf16.mxu0 0
    %1689 = vmatpush1.bf16.msra.mxu0 %v1534
    %1690 = vmatprep.subr.bf16.mxu0 0
    %1691 = vmatpush1.bf16.msra.mxu0 %v1533
    %1692 = vmatprep.subr.bf16.mxu0 0
    %1693 = vmatpush1.bf16.msra.mxu0 %v1532
    %1694 = vmatprep.subr.bf16.mxu0 0
    %1695 = vmatpush1.bf16.msra.mxu0 %v1531
    %1696 = vmatprep.subr.bf16.mxu0 0
    %1697 = vmatpush1.bf16.msra.mxu0 %v1530
    %1698 = vmatprep.subr.bf16.mxu0 0
    %1699 = vmatpush2.bf16.msra.mxu0 %v1545
    %1700 = vmatprep.subr.bf16.mxu0 0
    %1701 = vmatpush2.bf16.msra.mxu0 %v1544
    %1702 = vmatprep.subr.bf16.mxu0 0
    %1703 = vmatpush2.bf16.msra.mxu0 %v1543
    %1704 = vmatprep.subr.bf16.mxu0 0
    %1705 = vmatpush2.bf16.msra.mxu0 %v1542
    %1706 = vmatprep.subr.bf16.mxu0 0
    %1707 = vmatpush2.bf16.msra.mxu0 %v1541
    %1708 = vmatprep.subr.bf16.mxu0 0
    %1709 = vmatpush2.bf16.msra.mxu0 %v1540
    %1710 = vmatprep.subr.bf16.mxu0 0
    %1711 = vmatpush2.bf16.msra.mxu0 %v1539
    %1712 = vmatprep.subr.bf16.mxu0 0
    %1713 = vmatpush2.bf16.msra.mxu0 %v1538
    %1714 = vmatprep.mubr.bf16.mxu0 %v1125
    %1715 = vmatmul.mubr.bf16.gmra.mxu0 %v1124
    %v1716 = vpop.f32.mrf.mxu0
    %v1717 = vadd.f32 %v1677, %v1716
    %v1718 = vpop.f32.mrf.mxu0
    %v1719 = vpop.f32.mrf.mxu0
    %v1720 = vpop.f32.mrf.mxu0
    %1721 = vdwg.mxu0
    %1722 = vmatprep.subr.bf16.mxu0 0
    %1723 = vmatpush1.bf16.msra.mxu0 %v1553
    %1724 = vmatprep.subr.bf16.mxu0 0
    %1725 = vmatpush1.bf16.msra.mxu0 %v1552
    %1726 = vmatprep.subr.bf16.mxu0 0
    %1727 = vmatpush1.bf16.msra.mxu0 %v1551
    %1728 = vmatprep.subr.bf16.mxu0 0
    %1729 = vmatpush1.bf16.msra.mxu0 %v1550
    %1730 = vmatprep.subr.bf16.mxu0 0
    %1731 = vmatpush1.bf16.msra.mxu0 %v1549
    %1732 = vmatprep.subr.bf16.mxu0 0
    %1733 = vmatpush1.bf16.msra.mxu0 %v1548
    %1734 = vmatprep.subr.bf16.mxu0 0
    %1735 = vmatpush1.bf16.msra.mxu0 %v1547
    %1736 = vmatprep.subr.bf16.mxu0 0
    %1737 = vmatpush1.bf16.msra.mxu0 %v1546
    %1738 = vmatprep.subr.bf16.mxu0 0
    %1739 = vmatpush2.bf16.msra.mxu0 %v1561
    %1740 = vmatprep.subr.bf16.mxu0 0
    %1741 = vmatpush2.bf16.msra.mxu0 %v1560
    %1742 = vmatprep.subr.bf16.mxu0 0
    %1743 = vmatpush2.bf16.msra.mxu0 %v1559
    %1744 = vmatprep.subr.bf16.mxu0 0
    %1745 = vmatpush2.bf16.msra.mxu0 %v1558
    %1746 = vmatprep.subr.bf16.mxu0 0
    %1747 = vmatpush2.bf16.msra.mxu0 %v1557
    %1748 = vmatprep.subr.bf16.mxu0 0
    %1749 = vmatpush2.bf16.msra.mxu0 %v1556
    %1750 = vmatprep.subr.bf16.mxu0 0
    %1751 = vmatpush2.bf16.msra.mxu0 %v1555
    %1752 = vmatprep.subr.bf16.mxu0 0
    %1753 = vmatpush2.bf16.msra.mxu0 %v1554
    %1754 = vmatprep.mubr.bf16.mxu0 %v1127
    %1755 = vmatmul.mubr.bf16.gmra.mxu0 %v1126
    %v1756 = vpop.f32.mrf.mxu0
    %v1757 = vadd.f32 %v1717, %v1756
    %v1758 = vpop.f32.mrf.mxu0
    %v1759 = vpop.f32.mrf.mxu0
    %v1760 = vpop.f32.mrf.mxu0
    %1761 = vdwg.mxu0
    %1762 = vmatprep.subr.bf16.mxu0 0
    %1763 = vmatpush1.bf16.msra.mxu0 %v1569
    %1764 = vmatprep.subr.bf16.mxu0 0
    %1765 = vmatpush1.bf16.msra.mxu0 %v1568
    %1766 = vmatprep.subr.bf16.mxu0 0
    %1767 = vmatpush1.bf16.msra.mxu0 %v1567
    %1768 = vmatprep.subr.bf16.mxu0 0
    %1769 = vmatpush1.bf16.msra.mxu0 %v1566
    %1770 = vmatprep.subr.bf16.mxu0 0
    %1771 = vmatpush1.bf16.msra.mxu0 %v1565
    %1772 = vmatprep.subr.bf16.mxu0 0
    %1773 = vmatpush1.bf16.msra.mxu0 %v1564
    %1774 = vmatprep.subr.bf16.mxu0 0
    %1775 = vmatpush1.bf16.msra.mxu0 %v1563
    %1776 = vmatprep.subr.bf16.mxu0 0
    %1777 = vmatpush1.bf16.msra.mxu0 %v1562
    %1778 = vmatprep.subr.bf16.mxu0 0
    %1779 = vmatpush2.bf16.msra.mxu0 %v1577
    %1780 = vmatprep.subr.bf16.mxu0 0
    %1781 = vmatpush2.bf16.msra.mxu0 %v1576
    %1782 = vmatprep.subr.bf16.mxu0 0
    %1783 = vmatpush2.bf16.msra.mxu0 %v1575
    %1784 = vmatprep.subr.bf16.mxu0 0
    %1785 = vmatpush2.bf16.msra.mxu0 %v1574
    %1786 = vmatprep.subr.bf16.mxu0 0
    %1787 = vmatpush2.bf16.msra.mxu0 %v1573
    %1788 = vmatprep.subr.bf16.mxu0 0
    %1789 = vmatpush2.bf16.msra.mxu0 %v1572
    %1790 = vmatprep.subr.bf16.mxu0 0
    %1791 = vmatpush2.bf16.msra.mxu0 %v1571
    %1792 = vmatprep.subr.bf16.mxu0 0
    %1793 = vmatpush2.bf16.msra.mxu0 %v1570
    %1794 = vmatprep.mubr.bf16.mxu0 %v1129
    %1795 = vmatmul.mubr.bf16.gmra.mxu0 %v1128
    %v1796 = vpop.f32.mrf.mxu0
    %v1797 = vadd.f32 %v1757, %v1796
    %v1798 = vpop.f32.mrf.mxu0
    %v1799 = vpop.f32.mrf.mxu0
    %v1800 = vpop.f32.mrf.mxu0
    %1801 = vdwg.mxu0
    %v1802 = vpack.c.bf16 %v1797, %v1797
    %v1803 = vld [vmem:[%s4] sm:$0x1]
    %v1805 = vpack.i.b16 %v1803, %v1803
    %v1807 = vlaneseq
    %v1808 = vshrl.u32 %v1807, 7
    %v1809 = vsub.s32 0, %v1808
    %v1810 = vrot.slane %v1805, %v1809
    %v1811 = vadd.bf16 %v1802, %v1810
    %v1812 = vmax.bf16 %v1811, 0
    %v1813 = vmin.bf16 %v1812, 1065369472
    %v1814 = vld [vmem:[%s5] sm:$0xf]
    %v1815 = vld [vmem:[%s5 + $0x4] sm:$0xf]
    %v1816 = vld [vmem:[%s5 + $0x8] sm:$0xf]
    %v1817 = vld [vmem:[%s5 + $0xc] sm:$0xf]
    %v1818 = vld [vmem:[%s5 + $0x10] sm:$0xf]
    %v1819 = vld [vmem:[%s5 + $0x14] sm:$0xf]
    %v1820 = vld [vmem:[%s5 + $0x18] sm:$0xf]
    %v1821 = vld [vmem:[%s5 + $0x1c] sm:$0xf]
    %v1830 = vunpack.c.l.b16 %v1814
    %v1831 = vunpack.c.l.b16 %v1815
    %v1832 = vunpack.c.l.b16 %v1816
    %v1833 = vunpack.c.l.b16 %v1817
    %v1834 = vunpack.c.l.b16 %v1818
    %v1835 = vunpack.c.l.b16 %v1819
    %v1836 = vunpack.c.l.b16 %v1820
    %v1837 = vunpack.c.l.b16 %v1821
    %v1838 = vpack.c.b16 %v1831, %v1830
    %v1839 = vpack.c.b16 %v1833, %v1832
    %v1840 = vpack.c.b16 %v1835, %v1834
    %v1841 = vpack.c.b16 %v1837, %v1836
    %vm1846 = vcmask 523264
    %v1848 = vsel %vm1846, %v1813, 0
    %1850 = vmatprep.subr.bf16.mxu0 0
    %1851 = vmatpush1.bf16.msra.mxu0 0
    %1852 = vmatprep.subr.bf16.mxu0 0
    %1853 = vmatpush1.bf16.msra.mxu0 0
    %1854 = vmatprep.subr.bf16.mxu0 0
    %1855 = vmatpush1.bf16.msra.mxu0 0
    %1856 = vmatprep.subr.bf16.mxu0 0
    %1857 = vmatpush1.bf16.msra.mxu0 0
    %1858 = vmatprep.subr.bf16.mxu0 0
    %1859 = vmatpush1.bf16.msra.mxu0 %v1841
    %1860 = vmatprep.subr.bf16.mxu0 0
    %1861 = vmatpush1.bf16.msra.mxu0 %v1840
    %1862 = vmatprep.subr.bf16.mxu0 0
    %1863 = vmatpush1.bf16.msra.mxu0 %v1839
    %1864 = vmatprep.subr.bf16.mxu0 0
    %1865 = vmatpush1.bf16.msra.mxu0 %v1838
    %1866 = vmatprep.subr.bf16.mxu0 0
    %1867 = vmatpush2.bf16.msra.mxu0 0
    %1868 = vmatprep.subr.bf16.mxu0 0
    %1869 = vmatpush2.bf16.msra.mxu0 0
    %1870 = vmatprep.subr.bf16.mxu0 0
    %1871 = vmatpush2.bf16.msra.mxu0 0
    %1872 = vmatprep.subr.bf16.mxu0 0
    %1873 = vmatpush2.bf16.msra.mxu0 0
    %1874 = vmatprep.subr.bf16.mxu0 0
    %1875 = vmatpush2.bf16.msra.mxu0 0
    %1876 = vmatprep.subr.bf16.mxu0 0
    %1877 = vmatpush2.bf16.msra.mxu0 0
    %1878 = vmatprep.subr.bf16.mxu0 0
    %1879 = vmatpush2.bf16.msra.mxu0 0
    %1880 = vmatprep.subr.bf16.mxu0 0
    %1881 = vmatpush2.bf16.msra.mxu0 0
    %1882 = vmatprep.mubr.bf16.mxu0 0
    %1883 = vmatmul.mubr.bf16.gmra.mxu0 %v1848
    %v1884 = vpop.f32.mrf.mxu0
    %v1885 = vadd.f32 0.0, %v1884
    %v1886 = vpop.f32.mrf.mxu0
    %v1887 = vpop.f32.mrf.mxu0
    %v1888 = vpop.f32.mrf.mxu0
    %1889 = vdwg.mxu0
    %v1890 = vpack.c.bf16 %v1885, %v1885
    %v1891 = vld [vmem:[%s6] sm:$0x1]
    %v1893 = vpack.i.b16 %v1891, %v1891
    %v1895 = vlaneseq
    %v1896 = vshrl.u32 %v1895, 7
    %v1897 = vsub.s32 0, %v1896
    %v1898 = vrot.slane %v1893, %v1897
    %v1899 = vadd.bf16 %v1890, %v1898
    %v1900 = vmax.bf16 %v1899, 0
    %v1901 = vmin.bf16 %v1900, 1065369472
    %v1902 = vld [vmem:[%s7] sm:$0xf]
    %v1903 = vld [vmem:[%s7 + $0x4] sm:$0xf]
    %v1904 = vld [vmem:[%s7 + $0x8] sm:$0xf]
    %v1905 = vld [vmem:[%s7 + $0xc] sm:$0xf]
    %v1906 = vld [vmem:[%s8] sm:$0x1]
    %v1908 = vlaneseq
    %v1909 = vshrl.u32 %v1908, 7
    %v1910 = vsub.s32 0, %v1909
    %v1911 = vrot.slane %v1906, %v1910
    %v1917 = vunpack.c.l.b16 %v1902
    %v1918 = vunpack.c.l.b16 %v1903
    %v1919 = vunpack.c.l.b16 %v1904
    %v1920 = vunpack.c.l.b16 %v1905
    %v1921 = vpack.c.b16 %v1918, %v1917
    %v1922 = vpack.c.b16 %v1920, %v1919
    %vm1925 = vcmask 261120
    %v1927 = vsel %vm1925, %v1901, 0
    %1929 = vmatprep.subr.bf16.mxu0 0
    %1930 = vmatpush1.bf16.msra.mxu0 0
    %1931 = vmatprep.subr.bf16.mxu0 0
    %1932 = vmatpush1.bf16.msra.mxu0 0
    %1933 = vmatprep.subr.bf16.mxu0 0
    %1934 = vmatpush1.bf16.msra.mxu0 0
    %1935 = vmatprep.subr.bf16.mxu0 0
    %1936 = vmatpush1.bf16.msra.mxu0 0
    %1937 = vmatprep.subr.bf16.mxu0 0
    %1938 = vmatpush1.bf16.msra.mxu0 0
    %1939 = vmatprep.subr.bf16.mxu0 0
    %1940 = vmatpush1.bf16.msra.mxu0 0
    %1941 = vmatprep.subr.bf16.mxu0 0
    %1942 = vmatpush1.bf16.msra.mxu0 %v1922
    %1943 = vmatprep.subr.bf16.mxu0 0
    %1944 = vmatpush1.bf16.msra.mxu0 %v1921
    %1945 = vmatprep.subr.bf16.mxu0 0
    %1946 = vmatpush2.bf16.msra.mxu0 0
    %1947 = vmatprep.subr.bf16.mxu0 0
    %1948 = vmatpush2.bf16.msra.mxu0 0
    %1949 = vmatprep.subr.bf16.mxu0 0
    %1950 = vmatpush2.bf16.msra.mxu0 0
    %1951 = vmatprep.subr.bf16.mxu0 0
    %1952 = vmatpush2.bf16.msra.mxu0 0
    %1953 = vmatprep.subr.bf16.mxu0 0
    %1954 = vmatpush2.bf16.msra.mxu0 0
    %1955 = vmatprep.subr.bf16.mxu0 0
    %1956 = vmatpush2.bf16.msra.mxu0 0
    %1957 = vmatprep.subr.bf16.mxu0 0
    %1958 = vmatpush2.bf16.msra.mxu0 0
    %1959 = vmatprep.subr.bf16.mxu0 0
    %1960 = vmatpush2.bf16.msra.mxu0 0
    %1961 = vmatprep.mubr.bf16.mxu0 0
    %1962 = vmatmul.mubr.bf16.gmra.mxu0 %v1927
    %v1963 = vpop.f32.mrf.mxu0
    %v1964 = vadd.f32 %v1911, %v1963
    %v1965 = vpop.f32.mrf.mxu0
    %v1966 = vpop.f32.mrf.mxu0
    %v1967 = vpop.f32.mrf.mxu0
    %1968 = vdwg.mxu0
    %v1969 = vmul.f32 %v1964, 1.442695
    %v1970 = vpow.pop %v1969
    %1971 = vadd.xlane.f32.xlu0 %v1970
    %v1972 = vpop.xlane.xlu0 %1971
    %v1973 = vrcp.pop %v1972
    %v1974 = vmul.f32 %v1970, %v1973
    %vm1975 = vcmask 23552
    %1976 = vst.msk [vmem:[%s9] sm:$0xff] %vm1975, %v1974
    // Predicated region
    $region42: #{nnue_forward.1} parent=1 // pred_check
      _
    $region43: #{nnue_forward.1} parent=1 // pred_check_branch
      %1978 = sbr.rel (0) target = $region45
    $region44: #{nnue_forward.1} parent=1 // pred_region
      _
    $region45: #{nnue_forward.1} parent=1 // pred_fallthru
      _
    // Predicated region
    $region46: #{nnue_forward.1} parent=1 // pred_check
      _
    $region47: #{nnue_forward.1} parent=1 // pred_check_branch
      %1980 = sbr.rel (0) target = $region49
    $region48: #{nnue_forward.1} parent=1 // pred_region
      _
    $region49: #{nnue_forward.1} parent=1 // pred_fallthru
      _
    %1981 = vsyncpa [#allocation4], 1

</llo_original>
